<compile_context>
chip_gen: v7x
topology: tpu7x:2x2x1
jax: 0.10.0
libtpu: 0.0.40
codegen_flags: <defaults>
</compile_context>

<pallas_src>
import math
import functools

import jax
import jax.numpy as jnp
from jax.experimental import pallas as pl
from jax.experimental.pallas import tpu as pltpu


_LN_EPS = 1e-05


def _layernorm_rows(x):
    """LayerNormalization as in the torch module: unbiased std, eps on std,
    alpha = bias = 1.0 (their initialized values)."""
    d = x.shape[-1]
    mean = jnp.mean(x, axis=-1, keepdims=True)
    c = x - mean
    var_unbiased = jnp.sum(c * c, axis=-1, keepdims=True) / (d - 1)
    return c / (jnp.sqrt(var_unbiased) + _LN_EPS) + 1.0


# ----------------------------- Pallas kernels ------------------------------

def _attn_block_kernel(x_ref, mask_ref, wqkv_ref, bqkv_ref, wo_ref, bo_ref,
                       o_ref, *, heads, scale):
    """Fused: LayerNorm -> packed QKV projection -> per-head attention ->
    output projection -> residual add. One grid step per batch element."""
    x = x_ref[0]                          # (S, D)
    d = x.shape[-1]
    dk = d // heads

    n = _layernorm_rows(x)                # pre-norm, kept in vregs

    # One (S, D) @ (D, 3D) matmul for Q, K and V.
    qkv = (jnp.dot(n, wqkv_ref[...], preferred_element_type=jnp.float32)
           + bqkv_ref[...])               # (S, 3D)

    mask = mask_ref[...]                  # (Sq, Sk), shared across batch & heads
    wo = wo_ref[...]                      # (D, D)

    proj = None
    for h in range(heads):                # static unroll over heads
        qh = qkv[:, h * dk:(h + 1) * dk] * scale          # scale folded into Q
        kh = qkv[:, d + h * dk: d + (h + 1) * dk]
        vh = qkv[:, 2 * d + h * dk: 2 * d + (h + 1) * dk]

        # q @ k^T without an explicit transpose (contract on dk).
        s = jax.lax.dot_general(qh, kh, (((1,), (1,)), ((), ())),
                                preferred_element_type=jnp.float32)   # (Sq, Sk)
        s = jnp.where(mask == 0.0, -1.0e9, s)
        s = s - jnp.max(s, axis=-1, keepdims=True)
        p = jnp.exp(s)
        p = p * pl.reciprocal(jnp.sum(p, axis=-1, keepdims=True), approx=True)

        oh = jnp.dot(p, vh, preferred_element_type=jnp.float32)       # (Sq, dk)
        # (concat_h oh) @ Wo  ==  sum_h oh @ Wo[h*dk:(h+1)*dk, :]  (no concat).
        part = jnp.dot(oh, wo[h * dk:(h + 1) * dk, :],
                       preferred_element_type=jnp.float32)            # (Sq, D)
        proj = part if proj is None else proj + part

    # Output-projection bias + fused residual add.
    o_ref[0] = x + proj + bo_ref[...]


def _ffn_block_kernel(x_ref, w1_ref, b1_ref, w2_ref, b2_ref, o_ref):
    """Fused: LayerNorm -> Linear -> ReLU -> Linear -> residual add."""
    x = x_ref[...]                        # (TILE_N, D)
    n = _layernorm_rows(x)
    h = jnp.dot(n, w1_ref[...], preferred_element_type=jnp.float32) + b1_ref[...]
    h = jnp.maximum(h, 0.0)
    o_ref[...] = (x
                  + jnp.dot(h, w2_ref[...], preferred_element_type=jnp.float32)
                  + b2_ref[...])


def _layernorm_kernel(x_ref, o_ref):
    o_ref[...] = _layernorm_rows(x_ref[...])


# ----------------------------- wrappers -------------------------------------

def _row_tile(n, target=512):
    """Largest row tile <= target that divides n and is a multiple of 8 (or n)."""
    if n <= target:
        return n
    t = (target // 8) * 8
    while t >= 8:
        if n % t == 0:
            return t
        t -= 8
    return n


def attention_block(x, mask, p, heads):
    b, s, d = x.shape
    sq, sk = mask.shape
    kernel = functools.partial(_attn_block_kernel, heads=heads,
                               scale=1.0 / math.sqrt(heads))
    return pl.pallas_call(
        kernel,
        out_shape=jax.ShapeDtypeStruct((b, s, d), jnp.float32),
        grid=(b,),
        in_specs=[
            pl.BlockSpec((1, s, d), lambda i: (i, 0, 0)),
            # Single shared mask block for every grid step (no broadcast in HBM).
            # (A per-batch padding mask would be (B, Sq, Sk) with lambda i:(i,0,0).)
            pl.BlockSpec((sq, sk), lambda i: (0, 0)),
            pl.BlockSpec((d, 3 * d), lambda i: (0, 0)),   # weights resident
            pl.BlockSpec((1, 3 * d), lambda i: (0, 0)),
            pl.BlockSpec((d, d), lambda i: (0, 0)),
            pl.BlockSpec((1, d), lambda i: (0, 0)),
        ],
        out_specs=pl.BlockSpec((1, s, d), lambda i: (i, 0, 0)),
        compiler_params=pltpu.CompilerParams(dimension_semantics=("parallel",)),
    )(x, mask, p["wqkv"], p["bqkv"], p["wo"], p["bo"])


def ffn_block(x, p):
    b, s, d = x.shape
    n = b * s
    dff = p["w1"].shape[1]
    tn = _row_tile(n)
    y = pl.pallas_call(
        _ffn_block_kernel,
        out_shape=jax.ShapeDtypeStruct((n, d), jnp.float32),
        grid=(n // tn,),
        in_specs=[
            pl.BlockSpec((tn, d), lambda i: (i, 0)),
            pl.BlockSpec((d, dff), lambda i: (0, 0)),     # weights resident
            pl.BlockSpec((1, dff), lambda i: (0, 0)),
            pl.BlockSpec((dff, d), lambda i: (0, 0)),
            pl.BlockSpec((1, d), lambda i: (0, 0)),
        ],
        out_specs=pl.BlockSpec((tn, d), lambda i: (i, 0)),
        compiler_params=pltpu.CompilerParams(dimension_semantics=("parallel",)),
    )(x.reshape(n, d), p["w1"], p["b1"], p["w2"], p["b2"])
    return y.reshape(b, s, d)


def layernorm(x):
    b, s, d = x.shape
    n = b * s
    tn = _row_tile(n)
    y = pl.pallas_call(
        _layernorm_kernel,
        out_shape=jax.ShapeDtypeStruct((n, d), jnp.float32),
        grid=(n // tn,),
        in_specs=[pl.BlockSpec((tn, d), lambda i: (i, 0))],
        out_specs=pl.BlockSpec((tn, d), lambda i: (i, 0)),
        compiler_params=pltpu.CompilerParams(dimension_semantics=("parallel",)),
    )(x.reshape(n, d))
    return y.reshape(b, s, d)


def encoder_layer(x, mask, p, heads):
    x = attention_block(x, mask, p["attn"], heads)   # LN + MHA + residual (fused)
    x = ffn_block(x, p["ffn"])                       # LN + FFN + residual (fused)
    return x


def encoder(x, mask, params, heads):
    for p in params["layers"]:
        x = encoder_layer(x, mask, p, heads)
    return layernorm(x)                              # final LayerNormalization


# ----------------------------- parameter init -------------------------------

def init_params(key, d_model, d_ff, n_layers):
    def lin(k, din, dout):
        kw, kb = jax.random.split(k)
        bound = 1.0 / math.sqrt(din)
        w = jax.random.uniform(kw, (din, dout), jnp.float32, -bound, bound)
        b = jax.random.uniform(kb, (dout,), jnp.float32, -bound, bound)
        return w, b

    layers = []
    for lk in jax.random.split(key, n_layers):
        ks = jax.random.split(lk, 6)
        wq, bq = lin(ks[0], d_model, d_model)
        wk, bk = lin(ks[1], d_model, d_model)
        wv, bv = lin(ks[2], d_model, d_model)
        wo, bo = lin(ks[3], d_model, d_model)
        w1, b1 = lin(ks[4], d_model, d_ff)
        w2, b2 = lin(ks[5], d_ff, d_model)
        layers.append({
            "attn": {
                # Q/K/V weights packed ONCE outside the hot path -> one matmul.
                "wqkv": jnp.concatenate([wq, wk, wv], axis=1),
                "bqkv": jnp.concatenate([bq, bk, bv]).reshape(1, 3 * d_model),
                "wo": wo,
                "bo": bo.reshape(1, d_model),
            },
            "ffn": {
                "w1": w1, "b1": b1.reshape(1, d_ff),
                "w2": w2, "b2": b2.reshape(1, d_model),
            },
        })
    return {"layers": layers}


# ----------------------------- main ------------------------------------------

if __name__ == "__main__":
    B, S = 2, 8
    D_MODEL, HEADS, D_FF, N_LAYERS = 32, 4, 64, 2

    key = jax.random.PRNGKey(0)
    k_p, k_x = jax.random.split(key)

    params = init_params(k_p, D_MODEL, D_FF, N_LAYERS)
    x = jax.random.normal(k_x, (B, S, D_MODEL), jnp.float32)
    # all-ones source mask, shared across batch and heads
    mask = jnp.ones((S, S), jnp.float32)

    out = encoder(x, mask, params, HEADS)
    jax.block_until_ready(out)
    assert out.shape == (B, S, D_MODEL)
    print("KERNEL_OK")
</pallas_src>

<mosaic_0001>
module attributes {stable_mosaic.version = 11 : i64} {
  func.func @_attn_block_kernel(%arg0: i32, %arg1: memref<1x8x32xf32, #tpu.memory_space<vmem>>, %arg2: memref<8x8xf32, #tpu.memory_space<vmem>>, %arg3: memref<32x96xf32, #tpu.memory_space<vmem>>, %arg4: memref<1x96xf32, #tpu.memory_space<vmem>>, %arg5: memref<32x32xf32, #tpu.memory_space<vmem>>, %arg6: memref<1x32xf32, #tpu.memory_space<vmem>>, %arg7: memref<1x8x32xf32, #tpu.memory_space<vmem>>) attributes {dimension_semantics = [#tpu.dimension_semantics<parallel>], iteration_bounds = array<i64: 2>, scalar_prefetch = 0 : i64, scratch_operands = 0 : i64, tpu.core_type = #tpu.core_type<tc>, window_params = [{transform_indices = @transform_0, window_bounds = array<i64: 1, 8, 32>}, {pipeline_mode = #tpu.pipeline_mode<synchronous>, transform_indices = @transform_1, window_bounds = array<i64: 8, 8>}, {pipeline_mode = #tpu.pipeline_mode<synchronous>, transform_indices = @transform_2, window_bounds = array<i64: 32, 96>}, {pipeline_mode = #tpu.pipeline_mode<synchronous>, transform_indices = @transform_3, window_bounds = array<i64: 1, 96>}, {pipeline_mode = #tpu.pipeline_mode<synchronous>, transform_indices = @transform_4, window_bounds = array<i64: 32, 32>}, {pipeline_mode = #tpu.pipeline_mode<synchronous>, transform_indices = @transform_5, window_bounds = array<i64: 1, 32>}, {transform_indices = @transform_6, window_bounds = array<i64: 1, 8, 32>}]} {
    %c0 = arith.constant 0 : index
    %c0_0 = arith.constant 0 : index
    %c0_1 = arith.constant 0 : index
    %0 = vector.load %arg1[%c0, %c0_0, %c0_1] : memref<1x8x32xf32, #tpu.memory_space<vmem>>, vector<1x8x32xf32>
    %1 = vector.shape_cast %0 : vector<1x8x32xf32> to vector<8x32xf32>
    %cst = arith.constant dense<0.000000e+00> : vector<8xf32>
    %2 = vector.multi_reduction <add>, %1, %cst [1] : vector<8x32xf32> to vector<8xf32>
    %3 = vector.shape_cast %2 : vector<8xf32> to vector<8x1xf32>
    %cst_2 = arith.constant 3.200000e+01 : f32
    %4 = vector.broadcast %cst_2 : f32 to vector<8x1xf32>
    %5 = arith.divf %3, %4 : vector<8x1xf32>
    %6 = vector.broadcast %5 : vector<8x1xf32> to vector<8x32xf32>
    %7 = arith.subf %1, %6 : vector<8x32xf32>
    %8 = arith.mulf %7, %7 : vector<8x32xf32>
    %cst_3 = arith.constant dense<0.000000e+00> : vector<8xf32>
    %9 = vector.multi_reduction <add>, %8, %cst_3 [1] : vector<8x32xf32> to vector<8xf32>
    %10 = vector.shape_cast %9 : vector<8xf32> to vector<8x1xf32>
    %cst_4 = arith.constant 3.100000e+01 : f32
    %11 = vector.broadcast %cst_4 : f32 to vector<8x1xf32>
    %12 = arith.divf %10, %11 : vector<8x1xf32>
    %13 = math.sqrt %12 : vector<8x1xf32>
    %cst_5 = arith.constant 9.99999974E-6 : f32
    %14 = vector.broadcast %cst_5 : f32 to vector<8x1xf32>
    %15 = arith.addf %13, %14 : vector<8x1xf32>
    %16 = vector.broadcast %15 : vector<8x1xf32> to vector<8x32xf32>
    %17 = arith.divf %7, %16 : vector<8x32xf32>
    %cst_6 = arith.constant 1.000000e+00 : f32
    %18 = vector.broadcast %cst_6 : f32 to vector<8x32xf32>
    %19 = arith.addf %17, %18 : vector<8x32xf32>
    %c0_7 = arith.constant 0 : index
    %c0_8 = arith.constant 0 : index
    %20 = vector.load %arg3[%c0_7, %c0_8] : memref<32x96xf32, #tpu.memory_space<vmem>>, vector<32x96xf32>
    %cst_9 = arith.constant dense<0.000000e+00> : vector<8x96xf32>
    %21 = tpu.matmul %19, %20, %cst_9 {dimension_numbers = #tpu.dot_dimension_numbers<[1], [0], [0], [1], [0, 0, 1, 1], [], []>} : vector<8x32xf32>, vector<32x96xf32>, vector<8x96xf32> -> vector<8x96xf32>
    %c0_10 = arith.constant 0 : index
    %c0_11 = arith.constant 0 : index
    %22 = vector.load %arg4[%c0_10, %c0_11] : memref<1x96xf32, #tpu.memory_space<vmem>>, vector<1x96xf32>
    %23 = vector.broadcast %22 : vector<1x96xf32> to vector<8x96xf32>
    %24 = arith.addf %21, %23 : vector<8x96xf32>
    %c0_12 = arith.constant 0 : index
    %c0_13 = arith.constant 0 : index
    %25 = vector.load %arg2[%c0_12, %c0_13] : memref<8x8xf32, #tpu.memory_space<vmem>>, vector<8x8xf32>
    %c0_14 = arith.constant 0 : index
    %c0_15 = arith.constant 0 : index
    %26 = vector.load %arg5[%c0_14, %c0_15] : memref<32x32xf32, #tpu.memory_space<vmem>>, vector<32x32xf32>
    %27 = vector.extract_strided_slice %24 {offsets = [0, 0], sizes = [8, 8], strides = [1, 1]} : vector<8x96xf32> to vector<8x8xf32>
    %cst_16 = arith.constant 5.000000e-01 : f32
    %28 = vector.broadcast %cst_16 : f32 to vector<8x8xf32>
    %29 = arith.mulf %27, %28 : vector<8x8xf32>
    %30 = vector.extract_strided_slice %24 {offsets = [0, 32], sizes = [8, 8], strides = [1, 1]} : vector<8x96xf32> to vector<8x8xf32>
    %31 = vector.extract_strided_slice %24 {offsets = [0, 64], sizes = [8, 8], strides = [1, 1]} : vector<8x96xf32> to vector<8x8xf32>
    %cst_17 = arith.constant dense<0.000000e+00> : vector<8x8xf32>
    %32 = tpu.matmul %29, %30, %cst_17 {dimension_numbers = #tpu.dot_dimension_numbers<[1], [1], [0], [0], [0, 0, 1, 0], [], []>} : vector<8x8xf32>, vector<8x8xf32>, vector<8x8xf32> -> vector<8x8xf32>
    %cst_18 = arith.constant 0.000000e+00 : f32
    %33 = vector.broadcast %cst_18 : f32 to vector<8x8xf32>
    %34 = arith.cmpf oeq, %25, %33 : vector<8x8xf32>
    %cst_19 = arith.constant -1.000000e+09 : f32
    %35 = vector.broadcast %cst_19 : f32 to vector<8x8xf32>
    %36 = arith.select %34, %35, %32 : vector<8x8xi1>, vector<8x8xf32>
    %cst_20 = arith.constant dense<0xFF800000> : vector<8xf32>
    %37 = vector.multi_reduction <maximumf>, %36, %cst_20 [1] : vector<8x8xf32> to vector<8xf32>
    %38 = vector.shape_cast %37 : vector<8xf32> to vector<8x1xf32>
    %39 = vector.broadcast %38 : vector<8x1xf32> to vector<8x8xf32>
    %40 = arith.subf %36, %39 : vector<8x8xf32>
    %41 = math.exp %40 : vector<8x8xf32>
    %cst_21 = arith.constant dense<0.000000e+00> : vector<8xf32>
    %42 = vector.multi_reduction <add>, %41, %cst_21 [1] : vector<8x8xf32> to vector<8xf32>
    %43 = vector.shape_cast %42 : vector<8xf32> to vector<8x1xf32>
    %44 = tpu.reciprocal %43 {approx = true} : vector<8x1xf32> -> vector<8x1xf32>
    %45 = vector.broadcast %44 : vector<8x1xf32> to vector<8x8xf32>
    %46 = arith.mulf %41, %45 : vector<8x8xf32>
    %cst_22 = arith.constant dense<0.000000e+00> : vector<8x8xf32>
    %47 = tpu.matmul %46, %31, %cst_22 {dimension_numbers = #tpu.dot_dimension_numbers<[1], [0], [0], [1], [0, 0, 1, 1], [], []>} : vector<8x8xf32>, vector<8x8xf32>, vector<8x8xf32> -> vector<8x8xf32>
    %48 = vector.extract_strided_slice %26 {offsets = [0, 0], sizes = [8, 32], strides = [1, 1]} : vector<32x32xf32> to vector<8x32xf32>
    %cst_23 = arith.constant dense<0.000000e+00> : vector<8x32xf32>
    %49 = tpu.matmul %47, %48, %cst_23 {dimension_numbers = #tpu.dot_dimension_numbers<[1], [0], [0], [1], [0, 0, 1, 1], [], []>} : vector<8x8xf32>, vector<8x32xf32>, vector<8x32xf32> -> vector<8x32xf32>
    %50 = vector.extract_strided_slice %24 {offsets = [0, 8], sizes = [8, 8], strides = [1, 1]} : vector<8x96xf32> to vector<8x8xf32>
    %cst_24 = arith.constant 5.000000e-01 : f32
    %51 = vector.broadcast %cst_24 : f32 to vector<8x8xf32>
    %52 = arith.mulf %50, %51 : vector<8x8xf32>
    %53 = vector.extract_strided_slice %24 {offsets = [0, 40], sizes = [8, 8], strides = [1, 1]} : vector<8x96xf32> to vector<8x8xf32>
    %54 = vector.extract_strided_slice %24 {offsets = [0, 72], sizes = [8, 8], strides = [1, 1]} : vector<8x96xf32> to vector<8x8xf32>
    %cst_25 = arith.constant dense<0.000000e+00> : vector<8x8xf32>
    %55 = tpu.matmul %52, %53, %cst_25 {dimension_numbers = #tpu.dot_dimension_numbers<[1], [1], [0], [0], [0, 0, 1, 0], [], []>} : vector<8x8xf32>, vector<8x8xf32>, vector<8x8xf32> -> vector<8x8xf32>
    %cst_26 = arith.constant 0.000000e+00 : f32
    %56 = vector.broadcast %cst_26 : f32 to vector<8x8xf32>
    %57 = arith.cmpf oeq, %25, %56 : vector<8x8xf32>
    %cst_27 = arith.constant -1.000000e+09 : f32
    %58 = vector.broadcast %cst_27 : f32 to vector<8x8xf32>
    %59 = arith.select %57, %58, %55 : vector<8x8xi1>, vector<8x8xf32>
    %cst_28 = arith.constant dense<0xFF800000> : vector<8xf32>
    %60 = vector.multi_reduction <maximumf>, %59, %cst_28 [1] : vector<8x8xf32> to vector<8xf32>
    %61 = vector.shape_cast %60 : vector<8xf32> to vector<8x1xf32>
    %62 = vector.broadcast %61 : vector<8x1xf32> to vector<8x8xf32>
    %63 = arith.subf %59, %62 : vector<8x8xf32>
    %64 = math.exp %63 : vector<8x8xf32>
    %cst_29 = arith.constant dense<0.000000e+00> : vector<8xf32>
    %65 = vector.multi_reduction <add>, %64, %cst_29 [1] : vector<8x8xf32> to vector<8xf32>
    %66 = vector.shape_cast %65 : vector<8xf32> to vector<8x1xf32>
    %67 = tpu.reciprocal %66 {approx = true} : vector<8x1xf32> -> vector<8x1xf32>
    %68 = vector.broadcast %67 : vector<8x1xf32> to vector<8x8xf32>
    %69 = arith.mulf %64, %68 : vector<8x8xf32>
    %cst_30 = arith.constant dense<0.000000e+00> : vector<8x8xf32>
    %70 = tpu.matmul %69, %54, %cst_30 {dimension_numbers = #tpu.dot_dimension_numbers<[1], [0], [0], [1], [0, 0, 1, 1], [], []>} : vector<8x8xf32>, vector<8x8xf32>, vector<8x8xf32> -> vector<8x8xf32>
    %71 = vector.extract_strided_slice %26 {offsets = [8, 0], sizes = [8, 32], strides = [1, 1]} : vector<32x32xf32> to vector<8x32xf32>
    %cst_31 = arith.constant dense<0.000000e+00> : vector<8x32xf32>
    %72 = tpu.matmul %70, %71, %cst_31 {dimension_numbers = #tpu.dot_dimension_numbers<[1], [0], [0], [1], [0, 0, 1, 1], [], []>} : vector<8x8xf32>, vector<8x32xf32>, vector<8x32xf32> -> vector<8x32xf32>
    %73 = arith.addf %49, %72 : vector<8x32xf32>
    %74 = vector.extract_strided_slice %24 {offsets = [0, 16], sizes = [8, 8], strides = [1, 1]} : vector<8x96xf32> to vector<8x8xf32>
    %cst_32 = arith.constant 5.000000e-01 : f32
    %75 = vector.broadcast %cst_32 : f32 to vector<8x8xf32>
    %76 = arith.mulf %74, %75 : vector<8x8xf32>
    %77 = vector.extract_strided_slice %24 {offsets = [0, 48], sizes = [8, 8], strides = [1, 1]} : vector<8x96xf32> to vector<8x8xf32>
    %78 = vector.extract_strided_slice %24 {offsets = [0, 80], sizes = [8, 8], strides = [1, 1]} : vector<8x96xf32> to vector<8x8xf32>
    %cst_33 = arith.constant dense<0.000000e+00> : vector<8x8xf32>
    %79 = tpu.matmul %76, %77, %cst_33 {dimension_numbers = #tpu.dot_dimension_numbers<[1], [1], [0], [0], [0, 0, 1, 0], [], []>} : vector<8x8xf32>, vector<8x8xf32>, vector<8x8xf32> -> vector<8x8xf32>
    %cst_34 = arith.constant 0.000000e+00 : f32
    %80 = vector.broadcast %cst_34 : f32 to vector<8x8xf32>
    %81 = arith.cmpf oeq, %25, %80 : vector<8x8xf32>
    %cst_35 = arith.constant -1.000000e+09 : f32
    %82 = vector.broadcast %cst_35 : f32 to vector<8x8xf32>
    %83 = arith.select %81, %82, %79 : vector<8x8xi1>, vector<8x8xf32>
    %cst_36 = arith.constant dense<0xFF800000> : vector<8xf32>
    %84 = vector.multi_reduction <maximumf>, %83, %cst_36 [1] : vector<8x8xf32> to vector<8xf32>
    %85 = vector.shape_cast %84 : vector<8xf32> to vector<8x1xf32>
    %86 = vector.broadcast %85 : vector<8x1xf32> to vector<8x8xf32>
    %87 = arith.subf %83, %86 : vector<8x8xf32>
    %88 = math.exp %87 : vector<8x8xf32>
    %cst_37 = arith.constant dense<0.000000e+00> : vector<8xf32>
    %89 = vector.multi_reduction <add>, %88, %cst_37 [1] : vector<8x8xf32> to vector<8xf32>
    %90 = vector.shape_cast %89 : vector<8xf32> to vector<8x1xf32>
    %91 = tpu.reciprocal %90 {approx = true} : vector<8x1xf32> -> vector<8x1xf32>
    %92 = vector.broadcast %91 : vector<8x1xf32> to vector<8x8xf32>
    %93 = arith.mulf %88, %92 : vector<8x8xf32>
    %cst_38 = arith.constant dense<0.000000e+00> : vector<8x8xf32>
    %94 = tpu.matmul %93, %78, %cst_38 {dimension_numbers = #tpu.dot_dimension_numbers<[1], [0], [0], [1], [0, 0, 1, 1], [], []>} : vector<8x8xf32>, vector<8x8xf32>, vector<8x8xf32> -> vector<8x8xf32>
    %95 = vector.extract_strided_slice %26 {offsets = [16, 0], sizes = [8, 32], strides = [1, 1]} : vector<32x32xf32> to vector<8x32xf32>
    %cst_39 = arith.constant dense<0.000000e+00> : vector<8x32xf32>
    %96 = tpu.matmul %94, %95, %cst_39 {dimension_numbers = #tpu.dot_dimension_numbers<[1], [0], [0], [1], [0, 0, 1, 1], [], []>} : vector<8x8xf32>, vector<8x32xf32>, vector<8x32xf32> -> vector<8x32xf32>
    %97 = arith.addf %73, %96 : vector<8x32xf32>
    %98 = vector.extract_strided_slice %24 {offsets = [0, 24], sizes = [8, 8], strides = [1, 1]} : vector<8x96xf32> to vector<8x8xf32>
    %cst_40 = arith.constant 5.000000e-01 : f32
    %99 = vector.broadcast %cst_40 : f32 to vector<8x8xf32>
    %100 = arith.mulf %98, %99 : vector<8x8xf32>
    %101 = vector.extract_strided_slice %24 {offsets = [0, 56], sizes = [8, 8], strides = [1, 1]} : vector<8x96xf32> to vector<8x8xf32>
    %102 = vector.extract_strided_slice %24 {offsets = [0, 88], sizes = [8, 8], strides = [1, 1]} : vector<8x96xf32> to vector<8x8xf32>
    %cst_41 = arith.constant dense<0.000000e+00> : vector<8x8xf32>
    %103 = tpu.matmul %100, %101, %cst_41 {dimension_numbers = #tpu.dot_dimension_numbers<[1], [1], [0], [0], [0, 0, 1, 0], [], []>} : vector<8x8xf32>, vector<8x8xf32>, vector<8x8xf32> -> vector<8x8xf32>
    %cst_42 = arith.constant 0.000000e+00 : f32
    %104 = vector.broadcast %cst_42 : f32 to vector<8x8xf32>
    %105 = arith.cmpf oeq, %25, %104 : vector<8x8xf32>
    %cst_43 = arith.constant -1.000000e+09 : f32
    %106 = vector.broadcast %cst_43 : f32 to vector<8x8xf32>
    %107 = arith.select %105, %106, %103 : vector<8x8xi1>, vector<8x8xf32>
    %cst_44 = arith.constant dense<0xFF800000> : vector<8xf32>
    %108 = vector.multi_reduction <maximumf>, %107, %cst_44 [1] : vector<8x8xf32> to vector<8xf32>
    %109 = vector.shape_cast %108 : vector<8xf32> to vector<8x1xf32>
    %110 = vector.broadcast %109 : vector<8x1xf32> to vector<8x8xf32>
    %111 = arith.subf %107, %110 : vector<8x8xf32>
    %112 = math.exp %111 : vector<8x8xf32>
    %cst_45 = arith.constant dense<0.000000e+00> : vector<8xf32>
    %113 = vector.multi_reduction <add>, %112, %cst_45 [1] : vector<8x8xf32> to vector<8xf32>
    %114 = vector.shape_cast %113 : vector<8xf32> to vector<8x1xf32>
    %115 = tpu.reciprocal %114 {approx = true} : vector<8x1xf32> -> vector<8x1xf32>
    %116 = vector.broadcast %115 : vector<8x1xf32> to vector<8x8xf32>
    %117 = arith.mulf %112, %116 : vector<8x8xf32>
    %cst_46 = arith.constant dense<0.000000e+00> : vector<8x8xf32>
    %118 = tpu.matmul %117, %102, %cst_46 {dimension_numbers = #tpu.dot_dimension_numbers<[1], [0], [0], [1], [0, 0, 1, 1], [], []>} : vector<8x8xf32>, vector<8x8xf32>, vector<8x8xf32> -> vector<8x8xf32>
    %119 = vector.extract_strided_slice %26 {offsets = [24, 0], sizes = [8, 32], strides = [1, 1]} : vector<32x32xf32> to vector<8x32xf32>
    %cst_47 = arith.constant dense<0.000000e+00> : vector<8x32xf32>
    %120 = tpu.matmul %118, %119, %cst_47 {dimension_numbers = #tpu.dot_dimension_numbers<[1], [0], [0], [1], [0, 0, 1, 1], [], []>} : vector<8x8xf32>, vector<8x32xf32>, vector<8x32xf32> -> vector<8x32xf32>
    %121 = arith.addf %97, %120 : vector<8x32xf32>
    %122 = arith.addf %1, %121 : vector<8x32xf32>
    %c0_48 = arith.constant 0 : index
    %c0_49 = arith.constant 0 : index
    %123 = vector.load %arg6[%c0_48, %c0_49] : memref<1x32xf32, #tpu.memory_space<vmem>>, vector<1x32xf32>
    %124 = vector.broadcast %123 : vector<1x32xf32> to vector<8x32xf32>
    %125 = arith.addf %122, %124 : vector<8x32xf32>
    %c0_50 = arith.constant 0 : index
    %c0_51 = arith.constant 0 : index
    %c0_52 = arith.constant 0 : index
    %126 = vector.load %arg7[%c0_50, %c0_51, %c0_52] : memref<1x8x32xf32, #tpu.memory_space<vmem>>, vector<1x8x32xf32>
    %127 = vector.shape_cast %126 : vector<1x8x32xf32> to vector<8x32xf32>
    %128 = vector.shape_cast %125 : vector<8x32xf32> to vector<1x8x32xf32>
    tpu.vector_store %arg7[%c0_50, %c0_51, %c0_52], %128 {strides = array<i32>} : memref<1x8x32xf32, #tpu.memory_space<vmem>>, vector<1x8x32xf32>,
    return
  }
  func.func @transform_0(%arg0: i32) -> (i32, i32, i32) {
    %c0_i32 = arith.constant 0 : i32
    %c0_i32_0 = arith.constant 0 : i32
    %c0_i32_1 = arith.constant 0 : i32
    return %arg0, %c0_i32, %c0_i32_0 : i32, i32, i32
  }
  func.func @transform_1(%arg0: i32) -> (i32, i32) {
    %c0_i32 = arith.constant 0 : i32
    %c0_i32_0 = arith.constant 0 : i32
    %c0_i32_1 = arith.constant 0 : i32
    return %c0_i32, %c0_i32_0 : i32, i32
  }
  func.func @transform_2(%arg0: i32) -> (i32, i32) {
    %c0_i32 = arith.constant 0 : i32
    %c0_i32_0 = arith.constant 0 : i32
    %c0_i32_1 = arith.constant 0 : i32
    return %c0_i32, %c0_i32_0 : i32, i32
  }
  func.func @transform_3(%arg0: i32) -> (i32, i32) {
    %c0_i32 = arith.constant 0 : i32
    %c0_i32_0 = arith.constant 0 : i32
    %c0_i32_1 = arith.constant 0 : i32
    return %c0_i32, %c0_i32_0 : i32, i32
  }
  func.func @transform_4(%arg0: i32) -> (i32, i32) {
    %c0_i32 = arith.constant 0 : i32
    %c0_i32_0 = arith.constant 0 : i32
    %c0_i32_1 = arith.constant 0 : i32
    return %c0_i32, %c0_i32_0 : i32, i32
  }
  func.func @transform_5(%arg0: i32) -> (i32, i32) {
    %c0_i32 = arith.constant 0 : i32
    %c0_i32_0 = arith.constant 0 : i32
    %c0_i32_1 = arith.constant 0 : i32
    return %c0_i32, %c0_i32_0 : i32, i32
  }
  func.func @transform_6(%arg0: i32) -> (i32, i32, i32) {
    %c0_i32 = arith.constant 0 : i32
    %c0_i32_0 = arith.constant 0 : i32
    %c0_i32_1 = arith.constant 0 : i32
    return %arg0, %c0_i32, %c0_i32_0 : i32, i32, i32
  }
}

</mosaic_0001>

<llo_original>
// kernel: tpu_custom_call.1
$region0: #{tpu_custom_call.1}
  #allocation0 [shape = 'u32[]', space=smem, size = 0x4, offset = 0x4, fixed_abs, tag = 'smem constant byte address 0x4 - core index']
  #allocation1 [shape = 'u32[144,128]{1,0:T(1,128)}', space=vmem, size = 0x12000, scoped, tag = 'internal scratch']
  %s0 = inlined_call_operand.hbm [shape: f32[2,8,32], index: 0, kind: input, shape index: {}]
  %s1 = inlined_call_operand.hbm [shape: f32[8,8], index: 1, kind: input, shape index: {}]
  %s2 = inlined_call_operand.hbm [shape: f32[32,96], index: 2, kind: input, shape index: {}]
  %s3 = inlined_call_operand.vmem [shape: f32[1,96], index: 3, kind: input, shape index: {}]
  %s4 = inlined_call_operand.hbm [shape: f32[32,32], index: 4, kind: input, shape index: {}]
  %s5 = inlined_call_operand.vmem [shape: f32[1,32], index: 5, kind: input, shape index: {}]
  %s6 = inlined_call_operand.hbm [shape: f32[2,8,32], index: 6, kind: output, shape index: {}]
  %s7 = sld [smem:[#allocation0]]
  $region73: #{tpu_custom_call.1} parent=0
    _
  %s9 = ssub.s32 1, %s7
  %s10 = scalar_select 0, %s9, %s7
  $region1: #{tpu_custom_call.1} parent=0
    #allocation2 [shape = 'u8[8192]{0}', space=vmem, size = 0x2000, scoped, tag = 'input window, operand 0']
    #allocation3 [shape = 's32[2]{0}', space=sflag, size = 0x8, scoped, tag = 'scoped memory for tpu_custom_call.1']
    #allocation4 [shape = 's32[2]{0}', space=sflag, size = 0x8, scoped, tag = 'scoped memory for tpu_custom_call.1']
    #allocation5 [shape = 'u8[4096]{0}', space=vmem, size = 0x1000, scoped, tag = 'input window, operand 1, single buffered']
    #allocation6 [shape = 's32[1]{0}', space=sflag, size = 0x4, scoped, tag = 'scoped memory for tpu_custom_call.1']
    #allocation7 [shape = 'u8[16384]{0}', space=vmem, size = 0x4000, scoped, tag = 'input window, operand 2, single buffered']
    #allocation8 [shape = 'u8[16384]{0}', space=vmem, size = 0x4000, scoped, tag = 'input window, operand 4, single buffered']
    #allocation9 [shape = 's32[1]{0}', space=sflag, size = 0x4, scoped, tag = 'scoped memory for tpu_custom_call.1']
    #allocation10 [shape = 'u8[8192]{0}', space=vmem, size = 0x2000, scoped, tag = 'output window, operand 0']
    %11 = vsyncpa [#allocation3], 0
    %s12 = scalar_lea.sflag [#allocation3], 1
    %13 = vsyncpa %s12, 0
    %14 = vsyncpa [#allocation6], 0
    %15 = vsyncpa [#allocation9], 0
    %16 = vsyncpa [#allocation4], 0
    %s17 = scalar_lea.sflag [#allocation4], 1
    %18 = vsyncpa %s17, 0
    loop: start=0, step=1, limit=4
    $region2: #{tpu_custom_call.1} parent=1 // loop_pre_header
      _
    $region3: #{tpu_custom_call.1} parent=1 // loop_header
      %s20 = sphi 0, %s24
      %p21 = scmp.ge.s32.totalorder %s20, 4
      %s30 = sphi 0, %s32
      %s33 = sphi 0, %s30
      %s34 = sphi 0, %s33
      %s50 = sphi 0, %s34
      %s54 = sphi 0, %s54
      %s56 = sphi 0, %s54
      %s57 = sphi 0, %s56
      %s71 = sphi 0, %s57
      %s75 = sphi 0, %s75
      %s77 = sphi 0, %s75
      %s78 = sphi 0, %s77
      %s92 = sphi 0, %s78
      %s96 = sphi 0, %s96
      %s98 = sphi 0, %s96
      %s99 = sphi 0, %s98
      %s113 = sphi 0, %s99
      %s117 = sphi 0, %s117
      %s119 = sphi 0, %s117
      %s120 = sphi 0, %s119
      %s134 = sphi 0, %s120
      %s138 = sphi 0, %s138
      %s140 = sphi 0, %s138
      %s141 = sphi 0, %s140
      %s155 = sphi 0, %s141
      %s161 = sphi 0, %s163
      %s164 = sphi 0, %s161
      %s165 = sphi 0, %s164
      %s181 = sphi 0, %s165
    $region4: #{tpu_custom_call.1} parent=1 // loop_header_branch
      %23 = sbr.rel (%p21) target = $region8
    $region5: #{tpu_custom_call.1} parent=1 // loop_body
      %s25 = ssub.s32 %s20, 1
      %s26 = ssub.s32 %s20, 2
      %s27 = sadd.s32 %s20, 1
      %s28 = ssub.s32 %s20, %s27
      %p29 = scmp.eq.s32.totalorder %s28, 0
      %s31 = sadd.s32 %s30, 1
      %s32 = scalar_select %p29, %s30, %s31
      %p35 = pneg %p29
      %p36 = scmp.eq.s32.totalorder %s20, 1
      %p37 = por %p35, %p36
      %p38 = scmp.ne.s32.totalorder %s30, %s33
      %p39 = scmp.eq.s32.totalorder %s20, 0
      %p40 = por %p38, %p39
      %p41 = scmp.ne.s32.totalorder %s30, %s33
      %p42 = scmp.eq.s32.totalorder %s25, 1
      %p43 = por %p41, %p42
      %p44 = scmp.ne.s32.totalorder %s33, %s34
      %p45 = scmp.eq.s32.totalorder %s25, 0
      %p46 = por %p44, %p45
      %p47 = scmp.ne.s32.totalorder %s33, %s34
      %p48 = scmp.eq.s32.totalorder %s26, 1
      %p49 = por %p47, %p48
      %p51 = scmp.ne.s32.totalorder %s34, %s50
      %p52 = scmp.eq.s32.totalorder %s26, 0
      %p53 = por %p51, %p52
      %s55 = sadd.s32 %s54, 1
      %p58 = scmp.eq.s32.totalorder %s20, 1
      %p59 = scmp.ne.s32.totalorder %s54, %s56
      %p60 = scmp.eq.s32.totalorder %s20, 0
      %p61 = por %p59, %p60
      %p62 = scmp.ne.s32.totalorder %s54, %s56
      %p63 = scmp.eq.s32.totalorder %s25, 1
      %p64 = por %p62, %p63
      %p65 = scmp.ne.s32.totalorder %s56, %s57
      %p66 = scmp.eq.s32.totalorder %s25, 0
      %p67 = por %p65, %p66
      %p68 = scmp.ne.s32.totalorder %s56, %s57
      %p69 = scmp.eq.s32.totalorder %s26, 1
      %p70 = por %p68, %p69
      %p72 = scmp.ne.s32.totalorder %s57, %s71
      %p73 = scmp.eq.s32.totalorder %s26, 0
      %p74 = por %p72, %p73
      %s76 = sadd.s32 %s75, 1
      %p79 = scmp.eq.s32.totalorder %s20, 1
      %p80 = scmp.ne.s32.totalorder %s75, %s77
      %p81 = scmp.eq.s32.totalorder %s20, 0
      %p82 = por %p80, %p81
      %p83 = scmp.ne.s32.totalorder %s75, %s77
      %p84 = scmp.eq.s32.totalorder %s25, 1
      %p85 = por %p83, %p84
      %p86 = scmp.ne.s32.totalorder %s77, %s78
      %p87 = scmp.eq.s32.totalorder %s25, 0
      %p88 = por %p86, %p87
      %p89 = scmp.ne.s32.totalorder %s77, %s78
      %p90 = scmp.eq.s32.totalorder %s26, 1
      %p91 = por %p89, %p90
      %p93 = scmp.ne.s32.totalorder %s78, %s92
      %p94 = scmp.eq.s32.totalorder %s26, 0
      %p95 = por %p93, %p94
      %s97 = sadd.s32 %s96, 1
      %p100 = scmp.eq.s32.totalorder %s20, 1
      %p101 = scmp.ne.s32.totalorder %s96, %s98
      %p102 = scmp.eq.s32.totalorder %s20, 0
      %p103 = por %p101, %p102
      %p104 = scmp.ne.s32.totalorder %s96, %s98
      %p105 = scmp.eq.s32.totalorder %s25, 1
      %p106 = por %p104, %p105
      %p107 = scmp.ne.s32.totalorder %s98, %s99
      %p108 = scmp.eq.s32.totalorder %s25, 0
      %p109 = por %p107, %p108
      %p110 = scmp.ne.s32.totalorder %s98, %s99
      %p111 = scmp.eq.s32.totalorder %s26, 1
      %p112 = por %p110, %p111
      %p114 = scmp.ne.s32.totalorder %s99, %s113
      %p115 = scmp.eq.s32.totalorder %s26, 0
      %p116 = por %p114, %p115
      %s118 = sadd.s32 %s117, 1
      %p121 = scmp.eq.s32.totalorder %s20, 1
      %p122 = scmp.ne.s32.totalorder %s117, %s119
      %p123 = scmp.eq.s32.totalorder %s20, 0
      %p124 = por %p122, %p123
      %p125 = scmp.ne.s32.totalorder %s117, %s119
      %p126 = scmp.eq.s32.totalorder %s25, 1
      %p127 = por %p125, %p126
      %p128 = scmp.ne.s32.totalorder %s119, %s120
      %p129 = scmp.eq.s32.totalorder %s25, 0
      %p130 = por %p128, %p129
      %p131 = scmp.ne.s32.totalorder %s119, %s120
      %p132 = scmp.eq.s32.totalorder %s26, 1
      %p133 = por %p131, %p132
      %p135 = scmp.ne.s32.totalorder %s120, %s134
      %p136 = scmp.eq.s32.totalorder %s26, 0
      %p137 = por %p135, %p136
      %s139 = sadd.s32 %s138, 1
      %p142 = scmp.eq.s32.totalorder %s20, 1
      %p143 = scmp.ne.s32.totalorder %s138, %s140
      %p144 = scmp.eq.s32.totalorder %s20, 0
      %p145 = por %p143, %p144
      %p146 = scmp.ne.s32.totalorder %s138, %s140
      %p147 = scmp.eq.s32.totalorder %s25, 1
      %p148 = por %p146, %p147
      %p149 = scmp.ne.s32.totalorder %s140, %s141
      %p150 = scmp.eq.s32.totalorder %s25, 0
      %p151 = por %p149, %p150
      %p152 = scmp.ne.s32.totalorder %s140, %s141
      %p153 = scmp.eq.s32.totalorder %s26, 1
      %p154 = por %p152, %p153
      %p156 = scmp.ne.s32.totalorder %s141, %s155
      %p157 = scmp.eq.s32.totalorder %s26, 0
      %p158 = por %p156, %p157
      %s159 = ssub.s32 %s20, %s27
      %p160 = scmp.eq.s32.totalorder %s159, 0
      %s162 = sadd.s32 %s161, 1
      %s163 = scalar_select %p160, %s161, %s162
      %p166 = pneg %p160
      %p167 = scmp.eq.s32.totalorder %s20, 1
      %p168 = por %p166, %p167
      %p169 = scmp.ne.s32.totalorder %s161, %s164
      %p170 = scmp.eq.s32.totalorder %s20, 0
      %p171 = por %p169, %p170
      %p172 = scmp.ne.s32.totalorder %s161, %s164
      %p173 = scmp.eq.s32.totalorder %s25, 1
      %p174 = por %p172, %p173
      %p175 = scmp.ne.s32.totalorder %s164, %s165
      %p176 = scmp.eq.s32.totalorder %s25, 0
      %p177 = por %p175, %p176
      %p178 = scmp.ne.s32.totalorder %s164, %s165
      %p179 = scmp.eq.s32.totalorder %s26, 1
      %p180 = por %p178, %p179
      %p182 = scmp.ne.s32.totalorder %s165, %s181
      %p183 = scmp.eq.s32.totalorder %s26, 0
      %p184 = por %p182, %p183
      %p185 = scmp.le.s32.totalorder 1, %s20
      %p186 = scmp.lt.s32.totalorder %s20, 3
      %p187 = pnand %p185, %p186
      %p188 = pneg %p187
      // Predicated region
      $region9: #{tpu_custom_call.1} parent=5 // pred_check
        _
      $region10: #{tpu_custom_call.1} parent=5 // pred_check_branch
        %190 = sbr.rel (%p187) target = $region12
      $region11: #{tpu_custom_call.1} parent=5 // pred_region
        %s191 = ssub.s32 %s20, 1
        // Predicated region
        $region13: #{tpu_custom_call.1} parent=11 // pred_check
          %p192 = pneg %p67
        $region14: #{tpu_custom_call.1} parent=11 // pred_check_branch
          %194 = sbr.rel (%p192) target = $region16
        $region15: #{tpu_custom_call.1} parent=11 // pred_region
          %s196 = ssub.s32 128, 128
          %197 = vsyncadd [#allocation6], %s196
          %s199 = sshll.u32 [#allocation5], 4
          %s200 = int_to_ptr.vmem [resolvable:$true] %s199
          %202 = dma.hbm_to_vmem [thread:$0]  %s1, 128, %s200, [#allocation6]
        $region16: #{tpu_custom_call.1} parent=11 // pred_fallthru
          _
        // Predicated region
        $region17: #{tpu_custom_call.1} parent=11 // pred_check
          %p203 = pneg %p88
        $region18: #{tpu_custom_call.1} parent=11 // pred_check_branch
          %205 = sbr.rel (%p203) target = $region20
        $region19: #{tpu_custom_call.1} parent=11 // pred_region
          %s207 = ssub.s32 512, 512
          %208 = vsyncadd [#allocation6], %s207
          %s209 = sshll.u32 [#allocation7], 4
          %s210 = int_to_ptr.vmem [resolvable:$true] %s209
          %215 = dma.hbm_to_vmem [thread:$0]  %s2, 512, %s210, [#allocation6], 128, 128, 8
        $region20: #{tpu_custom_call.1} parent=11 // pred_fallthru
          _
        // Predicated region
        $region21: #{tpu_custom_call.1} parent=11 // pred_check
          %p216 = pneg %p109
        $region22: #{tpu_custom_call.1} parent=11 // pred_check_branch
          %218 = sbr.rel (%p216) target = $region24
        $region23: #{tpu_custom_call.1} parent=11 // pred_region
          _
        $region24: #{tpu_custom_call.1} parent=11 // pred_fallthru
          _
        // Predicated region
        $region25: #{tpu_custom_call.1} parent=11 // pred_check
          %p219 = pneg %p130
        $region26: #{tpu_custom_call.1} parent=11 // pred_check_branch
          %221 = sbr.rel (%p219) target = $region28
        $region27: #{tpu_custom_call.1} parent=11 // pred_region
          %s223 = ssub.s32 512, 512
          %224 = vsyncadd [#allocation9], %s223
          %s225 = sshll.u32 [#allocation8], 4
          %s226 = int_to_ptr.vmem [resolvable:$true] %s225
          %231 = dma.hbm_to_vmem [thread:$0]  %s4, 512, %s226, [#allocation9], 128, 128, 8
        $region28: #{tpu_custom_call.1} parent=11 // pred_fallthru
          _
        // Predicated region
        $region29: #{tpu_custom_call.1} parent=11 // pred_check
          %p232 = pneg %p151
        $region30: #{tpu_custom_call.1} parent=11 // pred_check_branch
          %234 = sbr.rel (%p232) target = $region32
        $region31: #{tpu_custom_call.1} parent=11 // pred_region
          _
        $region32: #{tpu_custom_call.1} parent=11 // pred_fallthru
          _
      $region12: #{tpu_custom_call.1} parent=5 // pred_fallthru
        _
      %p235 = scmp.lt.s32.totalorder %s20, 2
      // Predicated region
      $region33: #{tpu_custom_call.1} parent=5 // pred_check
        %p236 = pneg %p235
      $region34: #{tpu_custom_call.1} parent=5 // pred_check_branch
        %238 = sbr.rel (%p236) target = $region36
      $region35: #{tpu_custom_call.1} parent=5 // pred_region
        // Predicated region
        $region37: #{tpu_custom_call.1} parent=35 // pred_check
          %p239 = pneg %p40
        $region38: #{tpu_custom_call.1} parent=35 // pred_check_branch
          %241 = sbr.rel (%p239) target = $region40
        $region39: #{tpu_custom_call.1} parent=35 // pred_region
          %s242 = sand.u32 %s30, 1
          %s243 = scalar_lea.sflag [#allocation3], %s242
          %s244 = sand.u32 %s30, 1
          %s245 = smul.addr %s244, 8
          %s246 = scalar_lea.vmem [#allocation2], %s245
          %s248 = ssub.s32 128, 128
          %249 = vsyncadd %s243, %s248
          %s250 = smul.addr %s20, 128
          %s251 = scalar_lea.hbm %s0, %s250
          %s253 = sshll.u32 %s246, 4
          %s254 = int_to_ptr.vmem [resolvable:$true] %s253
          %256 = dma.hbm_to_vmem [thread:$0]  %s251, 128, %s254, %s243
        $region40: #{tpu_custom_call.1} parent=35 // pred_fallthru
          _
      $region36: #{tpu_custom_call.1} parent=5 // pred_fallthru
        _
      %p257 = scmp.le.s32.totalorder 1, %s20
      %p258 = scmp.lt.s32.totalorder %s20, 3
      %p259 = pnand %p257, %p258
      %p260 = pneg %p259
      // Predicated region
      $region41: #{tpu_custom_call.1} parent=5 // pred_check
        _
      $region42: #{tpu_custom_call.1} parent=5 // pred_check_branch
        %262 = sbr.rel (%p259) target = $region44
      $region43: #{tpu_custom_call.1} parent=5 // pred_region
        %s263 = ssub.s32 %s20, 1
        %s264 = sand.u32 %s33, 1
        %s265 = scalar_lea.sflag [#allocation3], %s264
        %s266 = sand.u32 %s33, 1
        %s267 = smul.addr %s266, 8
        %s268 = scalar_lea.vmem [#allocation2], %s267
        // Predicated region
        $region45: #{tpu_custom_call.1} parent=43 // pred_check
          %p269 = pneg %p46
        $region46: #{tpu_custom_call.1} parent=43 // pred_check_branch
          %271 = sbr.rel (%p269) target = $region48
        $region47: #{tpu_custom_call.1} parent=43 // pred_region
          %272 = dma.done %s265, 128
        $region48: #{tpu_custom_call.1} parent=43 // pred_fallthru
          _
        // Predicated region
        $region49: #{tpu_custom_call.1} parent=43 // pred_check
          %p273 = pneg %p67
        $region50: #{tpu_custom_call.1} parent=43 // pred_check_branch
          %275 = sbr.rel (%p273) target = $region52
        $region51: #{tpu_custom_call.1} parent=43 // pred_region
          %276 = dma.done [#allocation6], 128
        $region52: #{tpu_custom_call.1} parent=43 // pred_fallthru
          _
        // Predicated region
        $region53: #{tpu_custom_call.1} parent=43 // pred_check
          %p277 = pneg %p88
        $region54: #{tpu_custom_call.1} parent=43 // pred_check_branch
          %279 = sbr.rel (%p277) target = $region56
        $region55: #{tpu_custom_call.1} parent=43 // pred_region
          %280 = dma.done [#allocation6], 512
        $region56: #{tpu_custom_call.1} parent=43 // pred_fallthru
          _
        // Predicated region
        $region57: #{tpu_custom_call.1} parent=43 // pred_check
          %p281 = pneg %p130
        $region58: #{tpu_custom_call.1} parent=43 // pred_check_branch
          %283 = sbr.rel (%p281) target = $region60
        $region59: #{tpu_custom_call.1} parent=43 // pred_region
          %284 = dma.done [#allocation9], 512
        $region60: #{tpu_custom_call.1} parent=43 // pred_fallthru
          _
        %s285 = sand.u32 %s33, 1
        %s286 = scalar_lea.sflag [#allocation3], %s285
        %s287 = sand.u32 %s33, 1
        %s288 = smul.addr %s287, 8
        %s289 = scalar_lea.vmem [#allocation2], %s288
        %p290 = pneg %p46
        %p291 = pneg %p43
        %p292 = pneg %p67
        %p293 = pneg %p64
        %p294 = pneg %p88
        %p295 = pneg %p85
        %p296 = pneg %p109
        %p297 = pneg %p106
        %p298 = pneg %p130
        %p299 = pneg %p127
        %p300 = pneg %p151
        %p301 = pneg %p148
        %p302 = pneg %p177
        %p303 = pneg %p174
        %s304 = sand.u32 %s164, 1
        %s305 = scalar_lea.sflag [#allocation4], %s304
        %s306 = sand.u32 %s164, 1
        %s307 = smul.addr %s306, 8
        %s308 = scalar_lea.vmem [#allocation10], %s307
        %v309 = vld [vmem:[%s268] sm:$0xff]
        %vm310 = vcmask 261120
        %v311 = vsel %vm310, %v309, 0.0
        %312 = vadd.xlane.f32.xlu0 %v311
        %v313 = vpop.xlane.xlu0 %312
        %v314 = vrcp.pop 32.0
        %v315 = vmul.f32 %v313, %v314
        %v316 = vsub.f32 %v309, %v315
        %v317 = vmul.f32 %v316, %v316
        %v318 = vsel %vm310, %v317, 0.0
        %319 = vadd.xlane.f32.xlu0 %v318
        %v320 = vpop.xlane.xlu0 %319
        %v321 = vrcp.pop 31.0
        %v322 = vmul.f32 %v320, %v321
        %v323 = vrsqrt.pop %v322
        %v324 = vmul.f32 %v322, %v323
        %vm325 = vcmp.eq.f32.partialorder %v322, inf
        %v326 = vsel %vm325, %v322, %v324
        %vm327 = vcmp.eq.f32.partialorder %v322, 0.0
        %v328 = vand.u32 %v322, 2147483648
        %v329 = vsel %vm327, %v328, %v326
        %v330 = vadd.f32 %v329, 1e-05
        %v331 = vrcp.pop %v330
        %v332 = vmul.f32 %v316, %v331
        %v333 = vadd.f32 %v332, 1.0
        %v334 = vld [vmem:[#allocation7] sm:$0xff]
        %v335 = vld [vmem:[#allocation7 + $0x8] sm:$0xff]
        %v336 = vld [vmem:[#allocation7 + $0x10] sm:$0xff]
        %v337 = vld [vmem:[#allocation7 + $0x18] sm:$0xff]
        %v338 = vld [vmem:[%s3] sm:$0x1]
        %v340 = vlaneseq
        %v341 = vshrl.u32 %v340, 7
        %v342 = vsub.s32 0, %v341
        %v343 = vrot.slane %v338, %v342
        %v346 = vsel %vm310, %v333, 0
        %348 = vmatprep.subr.mxu0 0.0
        %349 = vmatpush1.msra.mxu0 %v334
        %350 = vmatprep.subr.mxu0 0.0
        %351 = vmatpush1.msra.mxu0 %v335
        %352 = vmatprep.subr.mxu0 0.0
        %353 = vmatpush1.msra.mxu0 %v336
        %354 = vmatprep.subr.mxu0 0.0
        %355 = vmatpush1.msra.mxu0 %v337
        %356 = vmatprep.subr.mxu0 0.0
        %357 = vmatpush1.msra.mxu0 0.0
        %358 = vmatprep.subr.mxu0 0.0
        %359 = vmatpush1.msra.mxu0 0.0
        %360 = vmatprep.subr.mxu0 0.0
        %361 = vmatpush1.msra.mxu0 0.0
        %362 = vmatprep.subr.mxu0 0.0
        %363 = vmatpush1.msra.mxu0 0.0
        %364 = vmatprep.subr.mxu0 0.0
        %365 = vmatpush1.msra.mxu0 0.0
        %366 = vmatprep.subr.mxu0 0.0
        %367 = vmatpush1.msra.mxu0 0.0
        %368 = vmatprep.subr.mxu0 0.0
        %369 = vmatpush1.msra.mxu0 0.0
        %370 = vmatprep.subr.mxu0 0.0
        %371 = vmatpush1.msra.mxu0 0.0
        %372 = vmatprep.subr.mxu0 0.0
        %373 = vmatpush1.msra.mxu0 0.0
        %374 = vmatprep.subr.mxu0 0.0
        %375 = vmatpush1.msra.mxu0 0.0
        %376 = vmatprep.subr.mxu0 0.0
        %377 = vmatpush1.msra.mxu0 0.0
        %378 = vmatprep.subr.mxu0 0.0
        %379 = vmatpush1.msra.mxu0 0.0
        %380 = vmatprep.subr.mxu0 0.0
        %381 = vmatpush1.msra.mxu0 0.0
        %382 = vmatprep.subr.mxu0 0.0
        %383 = vmatpush1.msra.mxu0 0.0
        %384 = vmatprep.subr.mxu0 0.0
        %385 = vmatpush1.msra.mxu0 0.0
        %386 = vmatprep.subr.mxu0 0.0
        %387 = vmatpush1.msra.mxu0 0.0
        %388 = vmatprep.subr.mxu0 0.0
        %389 = vmatpush1.msra.mxu0 0.0
        %390 = vmatprep.subr.mxu0 0.0
        %391 = vmatpush1.msra.mxu0 0.0
        %392 = vmatprep.subr.mxu0 0.0
        %393 = vmatpush1.msra.mxu0 0.0
        %394 = vmatprep.subr.mxu0 0.0
        %395 = vmatpush1.msra.mxu0 0.0
        %396 = vmatprep.subr.mxu0 0.0
        %397 = vmatpush1.msra.mxu0 0.0
        %398 = vmatprep.subr.mxu0 0.0
        %399 = vmatpush1.msra.mxu0 0.0
        %400 = vmatprep.subr.mxu0 0.0
        %401 = vmatpush1.msra.mxu0 0.0
        %402 = vmatprep.subr.mxu0 0.0
        %403 = vmatpush1.msra.mxu0 0.0
        %404 = vmatprep.subr.mxu0 0.0
        %405 = vmatpush1.msra.mxu0 0.0
        %406 = vmatprep.subr.mxu0 0.0
        %407 = vmatpush1.msra.mxu0 0.0
        %408 = vmatprep.subr.mxu0 0.0
        %409 = vmatpush1.msra.mxu0 0.0
        %410 = vmatprep.subr.mxu0 0.0
        %411 = vmatpush1.msra.mxu0 0.0
        %412 = vmatprep.mubr.f32.mxu0 0.0
        %413 = vmatmul.mubr.f32.gmra.mrb[0].mxu0 %v346
        %v414 = vpop.f32.mrb[0].mxu0
        %v415 = vadd.f32 %v343, %v414
        %v416 = vpop.f32.mrb[0].mxu0
        %417 = vdwg.mxu0
        %v418 = vld [vmem:[#allocation5] sm:$0xff]
        %v419 = vld [vmem:[#allocation8] sm:$0xff]
        %v420 = vld [vmem:[#allocation8 + $0x8] sm:$0xff]
        %v421 = vld [vmem:[#allocation8 + $0x10] sm:$0xff]
        %v422 = vld [vmem:[#allocation8 + $0x18] sm:$0xff]
        %v423 = vmul.f32 %v415, 0.5
        %425 = vrot.lane.b32.xlu0 %v415, 96
        %v426 = vpop.permute.xlu0 %425
        %vm427 = vcmask 64512
        %v429 = vsel %vm427, %v423, 0
        %v431 = vsel %vm427, %v426, 0
        %433 = vmatprep.subr.mxu0 0.0
        %434 = vmatpush1.xpose.msra.mxu0 %v431
        %435 = vmatprep.subr.mxu0 0.0
        %436 = vmatpush1.xpose.msra.mxu0 0.0
        %437 = vmatprep.subr.mxu0 0.0
        %438 = vmatpush1.xpose.msra.mxu0 0.0
        %439 = vmatprep.subr.mxu0 0.0
        %440 = vmatpush1.xpose.msra.mxu0 0.0
        %441 = vmatprep.subr.mxu0 0.0
        %442 = vmatpush1.xpose.msra.mxu0 0.0
        %443 = vmatprep.subr.mxu0 0.0
        %444 = vmatpush1.xpose.msra.mxu0 0.0
        %445 = vmatprep.subr.mxu0 0.0
        %446 = vmatpush1.xpose.msra.mxu0 0.0
        %447 = vmatprep.subr.mxu0 0.0
        %448 = vmatpush1.xpose.msra.mxu0 0.0
        %449 = vmatprep.subr.mxu0 0.0
        %450 = vmatpush1.xpose.msra.mxu0 0.0
        %451 = vmatprep.subr.mxu0 0.0
        %452 = vmatpush1.xpose.msra.mxu0 0.0
        %453 = vmatprep.subr.mxu0 0.0
        %454 = vmatpush1.xpose.msra.mxu0 0.0
        %455 = vmatprep.subr.mxu0 0.0
        %456 = vmatpush1.xpose.msra.mxu0 0.0
        %457 = vmatprep.subr.mxu0 0.0
        %458 = vmatpush1.xpose.msra.mxu0 0.0
        %459 = vmatprep.subr.mxu0 0.0
        %460 = vmatpush1.xpose.msra.mxu0 0.0
        %461 = vmatprep.subr.mxu0 0.0
        %462 = vmatpush1.xpose.msra.mxu0 0.0
        %463 = vmatprep.subr.mxu0 0.0
        %464 = vmatpush1.xpose.msra.mxu0 0.0
        %465 = vmatprep.subr.mxu0 0.0
        %466 = vmatpush1.xpose.msra.mxu0 0.0
        %467 = vmatprep.subr.mxu0 0.0
        %468 = vmatpush1.xpose.msra.mxu0 0.0
        %469 = vmatprep.subr.mxu0 0.0
        %470 = vmatpush1.xpose.msra.mxu0 0.0
        %471 = vmatprep.subr.mxu0 0.0
        %472 = vmatpush1.xpose.msra.mxu0 0.0
        %473 = vmatprep.subr.mxu0 0.0
        %474 = vmatpush1.xpose.msra.mxu0 0.0
        %475 = vmatprep.subr.mxu0 0.0
        %476 = vmatpush1.xpose.msra.mxu0 0.0
        %477 = vmatprep.subr.mxu0 0.0
        %478 = vmatpush1.xpose.msra.mxu0 0.0
        %479 = vmatprep.subr.mxu0 0.0
        %480 = vmatpush1.xpose.msra.mxu0 0.0
        %481 = vmatprep.subr.mxu0 0.0
        %482 = vmatpush1.xpose.msra.mxu0 0.0
        %483 = vmatprep.subr.mxu0 0.0
        %484 = vmatpush1.xpose.msra.mxu0 0.0
        %485 = vmatprep.subr.mxu0 0.0
        %486 = vmatpush1.xpose.msra.mxu0 0.0
        %487 = vmatprep.subr.mxu0 0.0
        %488 = vmatpush1.xpose.msra.mxu0 0.0
        %489 = vmatprep.subr.mxu0 0.0
        %490 = vmatpush1.xpose.msra.mxu0 0.0
        %491 = vmatprep.subr.mxu0 0.0
        %492 = vmatpush1.xpose.msra.mxu0 0.0
        %493 = vmatprep.subr.mxu0 0.0
        %494 = vmatpush1.xpose.msra.mxu0 0.0
        %495 = vmatprep.subr.mxu0 0.0
        %496 = vmatpush1.xpose.msra.mxu0 0.0
        %497 = vmatprep.mubr.f32.mxu0 0.0
        %498 = vmatmul.mubr.f32.gmra.mrb[0].mxu0 %v429
        %v499 = vpop.f32.mrb[0].mxu0
        %v500 = vadd.f32 0.0, %v499
        %v501 = vpop.f32.mrb[0].mxu0
        %502 = vdwg.mxu0
        %vm503 = vcmp.eq.f32.partialorder %v418, 0.0
        %v504 = vsel %vm503, -1e+09, %v500
        %v505 = vsel %vm427, %v504, -inf
        %506 = vmax.xlane.f32.xlu0 %v505
        %v507 = vpop.xlane.xlu0 %506
        %v508 = vsub.f32 %v504, %v507
        %v509 = vmul.f32 %v508, 1.442695
        %v510 = vpow.pop %v509
        %v511 = vsel %vm427, %v510, 0.0
        %512 = vadd.xlane.f32.xlu0 %v511
        %v513 = vpop.xlane.xlu0 %512
        %v514 = vrcp.pop %v513
        %v515 = vmul.f32 %v510, %v514
        %516 = vrot.lane.b32.xlu0 %v415, 64
        %v517 = vpop.permute.xlu0 %516
        %v520 = vsel %vm427, %v515, 0
        %522 = vmatprep.subr.mxu0 0.0
        %523 = vmatpush1.msra.mxu0 %v517
        %524 = vmatprep.subr.mxu0 0.0
        %525 = vmatpush1.msra.mxu0 0.0
        %526 = vmatprep.subr.mxu0 0.0
        %527 = vmatpush1.msra.mxu0 0.0
        %528 = vmatprep.subr.mxu0 0.0
        %529 = vmatpush1.msra.mxu0 0.0
        %530 = vmatprep.subr.mxu0 0.0
        %531 = vmatpush1.msra.mxu0 0.0
        %532 = vmatprep.subr.mxu0 0.0
        %533 = vmatpush1.msra.mxu0 0.0
        %534 = vmatprep.subr.mxu0 0.0
        %535 = vmatpush1.msra.mxu0 0.0
        %536 = vmatprep.subr.mxu0 0.0
        %537 = vmatpush1.msra.mxu0 0.0
        %538 = vmatprep.subr.mxu0 0.0
        %539 = vmatpush1.msra.mxu0 0.0
        %540 = vmatprep.subr.mxu0 0.0
        %541 = vmatpush1.msra.mxu0 0.0
        %542 = vmatprep.subr.mxu0 0.0
        %543 = vmatpush1.msra.mxu0 0.0
        %544 = vmatprep.subr.mxu0 0.0
        %545 = vmatpush1.msra.mxu0 0.0
        %546 = vmatprep.subr.mxu0 0.0
        %547 = vmatpush1.msra.mxu0 0.0
        %548 = vmatprep.subr.mxu0 0.0
        %549 = vmatpush1.msra.mxu0 0.0
        %550 = vmatprep.subr.mxu0 0.0
        %551 = vmatpush1.msra.mxu0 0.0
        %552 = vmatprep.subr.mxu0 0.0
        %553 = vmatpush1.msra.mxu0 0.0
        %554 = vmatprep.subr.mxu0 0.0
        %555 = vmatpush1.msra.mxu0 0.0
        %556 = vmatprep.subr.mxu0 0.0
        %557 = vmatpush1.msra.mxu0 0.0
        %558 = vmatprep.subr.mxu0 0.0
        %559 = vmatpush1.msra.mxu0 0.0
        %560 = vmatprep.subr.mxu0 0.0
        %561 = vmatpush1.msra.mxu0 0.0
        %562 = vmatprep.subr.mxu0 0.0
        %563 = vmatpush1.msra.mxu0 0.0
        %564 = vmatprep.subr.mxu0 0.0
        %565 = vmatpush1.msra.mxu0 0.0
        %566 = vmatprep.subr.mxu0 0.0
        %567 = vmatpush1.msra.mxu0 0.0
        %568 = vmatprep.subr.mxu0 0.0
        %569 = vmatpush1.msra.mxu0 0.0
        %570 = vmatprep.subr.mxu0 0.0
        %571 = vmatpush1.msra.mxu0 0.0
        %572 = vmatprep.subr.mxu0 0.0
        %573 = vmatpush1.msra.mxu0 0.0
        %574 = vmatprep.subr.mxu0 0.0
        %575 = vmatpush1.msra.mxu0 0.0
        %576 = vmatprep.subr.mxu0 0.0
        %577 = vmatpush1.msra.mxu0 0.0
        %578 = vmatprep.subr.mxu0 0.0
        %579 = vmatpush1.msra.mxu0 0.0
        %580 = vmatprep.subr.mxu0 0.0
        %581 = vmatpush1.msra.mxu0 0.0
        %582 = vmatprep.subr.mxu0 0.0
        %583 = vmatpush1.msra.mxu0 0.0
        %584 = vmatprep.subr.mxu0 0.0
        %585 = vmatpush1.msra.mxu0 0.0
        %586 = vmatprep.mubr.f32.mxu0 0.0
        %587 = vmatmul.mubr.f32.gmra.mrb[0].mxu0 %v520
        %v588 = vpop.f32.mrb[0].mxu0
        %v589 = vadd.f32 0.0, %v588
        %v590 = vpop.f32.mrb[0].mxu0
        %591 = vdwg.mxu0
        %592 = vrot.lane.b32.xlu0 %v423, 120
        %v593 = vpop.permute.xlu0 %592
        %594 = vrot.lane.b32.xlu0 %v415, 88
        %v595 = vpop.permute.xlu0 %594
        %v596 = vsel %vm427, %v593, 0
        %v598 = vsel %vm427, %v595, 0
        %600 = vmatprep.subr.mxu0 0.0
        %601 = vmatpush1.xpose.msra.mxu0 %v598
        %602 = vmatprep.subr.mxu0 0.0
        %603 = vmatpush1.xpose.msra.mxu0 0.0
        %604 = vmatprep.subr.mxu0 0.0
        %605 = vmatpush1.xpose.msra.mxu0 0.0
        %606 = vmatprep.subr.mxu0 0.0
        %607 = vmatpush1.xpose.msra.mxu0 0.0
        %608 = vmatprep.subr.mxu0 0.0
        %609 = vmatpush1.xpose.msra.mxu0 0.0
        %610 = vmatprep.subr.mxu0 0.0
        %611 = vmatpush1.xpose.msra.mxu0 0.0
        %612 = vmatprep.subr.mxu0 0.0
        %613 = vmatpush1.xpose.msra.mxu0 0.0
        %614 = vmatprep.subr.mxu0 0.0
        %615 = vmatpush1.xpose.msra.mxu0 0.0
        %616 = vmatprep.subr.mxu0 0.0
        %617 = vmatpush1.xpose.msra.mxu0 0.0
        %618 = vmatprep.subr.mxu0 0.0
        %619 = vmatpush1.xpose.msra.mxu0 0.0
        %620 = vmatprep.subr.mxu0 0.0
        %621 = vmatpush1.xpose.msra.mxu0 0.0
        %622 = vmatprep.subr.mxu0 0.0
        %623 = vmatpush1.xpose.msra.mxu0 0.0
        %624 = vmatprep.subr.mxu0 0.0
        %625 = vmatpush1.xpose.msra.mxu0 0.0
        %626 = vmatprep.subr.mxu0 0.0
        %627 = vmatpush1.xpose.msra.mxu0 0.0
        %628 = vmatprep.subr.mxu0 0.0
        %629 = vmatpush1.xpose.msra.mxu0 0.0
        %630 = vmatprep.subr.mxu0 0.0
        %631 = vmatpush1.xpose.msra.mxu0 0.0
        %632 = vmatprep.subr.mxu0 0.0
        %633 = vmatpush1.xpose.msra.mxu0 0.0
        %634 = vmatprep.subr.mxu0 0.0
        %635 = vmatpush1.xpose.msra.mxu0 0.0
        %636 = vmatprep.subr.mxu0 0.0
        %637 = vmatpush1.xpose.msra.mxu0 0.0
        %638 = vmatprep.subr.mxu0 0.0
        %639 = vmatpush1.xpose.msra.mxu0 0.0
        %640 = vmatprep.subr.mxu0 0.0
        %641 = vmatpush1.xpose.msra.mxu0 0.0
        %642 = vmatprep.subr.mxu0 0.0
        %643 = vmatpush1.xpose.msra.mxu0 0.0
        %644 = vmatprep.subr.mxu0 0.0
        %645 = vmatpush1.xpose.msra.mxu0 0.0
        %646 = vmatprep.subr.mxu0 0.0
        %647 = vmatpush1.xpose.msra.mxu0 0.0
        %648 = vmatprep.subr.mxu0 0.0
        %649 = vmatpush1.xpose.msra.mxu0 0.0
        %650 = vmatprep.subr.mxu0 0.0
        %651 = vmatpush1.xpose.msra.mxu0 0.0
        %652 = vmatprep.subr.mxu0 0.0
        %653 = vmatpush1.xpose.msra.mxu0 0.0
        %654 = vmatprep.subr.mxu0 0.0
        %655 = vmatpush1.xpose.msra.mxu0 0.0
        %656 = vmatprep.subr.mxu0 0.0
        %657 = vmatpush1.xpose.msra.mxu0 0.0
        %658 = vmatprep.subr.mxu0 0.0
        %659 = vmatpush1.xpose.msra.mxu0 0.0
        %660 = vmatprep.subr.mxu0 0.0
        %661 = vmatpush1.xpose.msra.mxu0 0.0
        %662 = vmatprep.subr.mxu0 0.0
        %663 = vmatpush1.xpose.msra.mxu0 0.0
        %664 = vmatprep.mubr.f32.mxu0 0.0
        %665 = vmatmul.mubr.f32.gmra.mrb[0].mxu0 %v596
        %v666 = vpop.f32.mrb[0].mxu0
        %v667 = vadd.f32 0.0, %v666
        %v668 = vpop.f32.mrb[0].mxu0
        %669 = vdwg.mxu0
        %v670 = vsel %vm503, -1e+09, %v667
        %v671 = vsel %vm427, %v670, -inf
        %672 = vmax.xlane.f32.xlu0 %v671
        %v673 = vpop.xlane.xlu0 %672
        %v674 = vsub.f32 %v670, %v673
        %v675 = vmul.f32 %v674, 1.442695
        %v676 = vpow.pop %v675
        %v677 = vsel %vm427, %v676, 0.0
        %678 = vadd.xlane.f32.xlu0 %v677
        %v679 = vpop.xlane.xlu0 %678
        %v680 = vrcp.pop %v679
        %v681 = vmul.f32 %v676, %v680
        %682 = vrot.lane.b32.xlu0 %v415, 56
        %v683 = vpop.permute.xlu0 %682
        %v686 = vsel %vm427, %v681, 0
        %688 = vmatprep.subr.mxu0 0.0
        %689 = vmatpush1.msra.mxu0 %v683
        %690 = vmatprep.subr.mxu0 0.0
        %691 = vmatpush1.msra.mxu0 0.0
        %692 = vmatprep.subr.mxu0 0.0
        %693 = vmatpush1.msra.mxu0 0.0
        %694 = vmatprep.subr.mxu0 0.0
        %695 = vmatpush1.msra.mxu0 0.0
        %696 = vmatprep.subr.mxu0 0.0
        %697 = vmatpush1.msra.mxu0 0.0
        %698 = vmatprep.subr.mxu0 0.0
        %699 = vmatpush1.msra.mxu0 0.0
        %700 = vmatprep.subr.mxu0 0.0
        %701 = vmatpush1.msra.mxu0 0.0
        %702 = vmatprep.subr.mxu0 0.0
        %703 = vmatpush1.msra.mxu0 0.0
        %704 = vmatprep.subr.mxu0 0.0
        %705 = vmatpush1.msra.mxu0 0.0
        %706 = vmatprep.subr.mxu0 0.0
        %707 = vmatpush1.msra.mxu0 0.0
        %708 = vmatprep.subr.mxu0 0.0
        %709 = vmatpush1.msra.mxu0 0.0
        %710 = vmatprep.subr.mxu0 0.0
        %711 = vmatpush1.msra.mxu0 0.0
        %712 = vmatprep.subr.mxu0 0.0
        %713 = vmatpush1.msra.mxu0 0.0
        %714 = vmatprep.subr.mxu0 0.0
        %715 = vmatpush1.msra.mxu0 0.0
        %716 = vmatprep.subr.mxu0 0.0
        %717 = vmatpush1.msra.mxu0 0.0
        %718 = vmatprep.subr.mxu0 0.0
        %719 = vmatpush1.msra.mxu0 0.0
        %720 = vmatprep.subr.mxu0 0.0
        %721 = vmatpush1.msra.mxu0 0.0
        %722 = vmatprep.subr.mxu0 0.0
        %723 = vmatpush1.msra.mxu0 0.0
        %724 = vmatprep.subr.mxu0 0.0
        %725 = vmatpush1.msra.mxu0 0.0
        %726 = vmatprep.subr.mxu0 0.0
        %727 = vmatpush1.msra.mxu0 0.0
        %728 = vmatprep.subr.mxu0 0.0
        %729 = vmatpush1.msra.mxu0 0.0
        %730 = vmatprep.subr.mxu0 0.0
        %731 = vmatpush1.msra.mxu0 0.0
        %732 = vmatprep.subr.mxu0 0.0
        %733 = vmatpush1.msra.mxu0 0.0
        %734 = vmatprep.subr.mxu0 0.0
        %735 = vmatpush1.msra.mxu0 0.0
        %736 = vmatprep.subr.mxu0 0.0
        %737 = vmatpush1.msra.mxu0 0.0
        %738 = vmatprep.subr.mxu0 0.0
        %739 = vmatpush1.msra.mxu0 0.0
        %740 = vmatprep.subr.mxu0 0.0
        %741 = vmatpush1.msra.mxu0 0.0
        %742 = vmatprep.subr.mxu0 0.0
        %743 = vmatpush1.msra.mxu0 0.0
        %744 = vmatprep.subr.mxu0 0.0
        %745 = vmatpush1.msra.mxu0 0.0
        %746 = vmatprep.subr.mxu0 0.0
        %747 = vmatpush1.msra.mxu0 0.0
        %748 = vmatprep.subr.mxu0 0.0
        %749 = vmatpush1.msra.mxu0 0.0
        %750 = vmatprep.subr.mxu0 0.0
        %751 = vmatpush1.msra.mxu0 0.0
        %752 = vmatprep.mubr.f32.mxu0 0.0
        %753 = vmatmul.mubr.f32.gmra.mrb[0].mxu0 %v686
        %v754 = vpop.f32.mrb[0].mxu0
        %v755 = vadd.f32 0.0, %v754
        %v756 = vpop.f32.mrb[0].mxu0
        %757 = vdwg.mxu0
        %v759 = vsel %vm427, %v755, 0
        %761 = vmatprep.subr.mxu0 0.0
        %762 = vmatpush1.msra.mxu0 %v420
        %763 = vmatprep.subr.mxu0 0.0
        %764 = vmatpush1.msra.mxu0 0.0
        %765 = vmatprep.subr.mxu0 0.0
        %766 = vmatpush1.msra.mxu0 0.0
        %767 = vmatprep.subr.mxu0 0.0
        %768 = vmatpush1.msra.mxu0 0.0
        %769 = vmatprep.subr.mxu0 0.0
        %770 = vmatpush1.msra.mxu0 0.0
        %771 = vmatprep.subr.mxu0 0.0
        %772 = vmatpush1.msra.mxu0 0.0
        %773 = vmatprep.subr.mxu0 0.0
        %774 = vmatpush1.msra.mxu0 0.0
        %775 = vmatprep.subr.mxu0 0.0
        %776 = vmatpush1.msra.mxu0 0.0
        %777 = vmatprep.subr.mxu0 0.0
        %778 = vmatpush1.msra.mxu0 0.0
        %779 = vmatprep.subr.mxu0 0.0
        %780 = vmatpush1.msra.mxu0 0.0
        %781 = vmatprep.subr.mxu0 0.0
        %782 = vmatpush1.msra.mxu0 0.0
        %783 = vmatprep.subr.mxu0 0.0
        %784 = vmatpush1.msra.mxu0 0.0
        %785 = vmatprep.subr.mxu0 0.0
        %786 = vmatpush1.msra.mxu0 0.0
        %787 = vmatprep.subr.mxu0 0.0
        %788 = vmatpush1.msra.mxu0 0.0
        %789 = vmatprep.subr.mxu0 0.0
        %790 = vmatpush1.msra.mxu0 0.0
        %791 = vmatprep.subr.mxu0 0.0
        %792 = vmatpush1.msra.mxu0 0.0
        %793 = vmatprep.subr.mxu0 0.0
        %794 = vmatpush1.msra.mxu0 0.0
        %795 = vmatprep.subr.mxu0 0.0
        %796 = vmatpush1.msra.mxu0 0.0
        %797 = vmatprep.subr.mxu0 0.0
        %798 = vmatpush1.msra.mxu0 0.0
        %799 = vmatprep.subr.mxu0 0.0
        %800 = vmatpush1.msra.mxu0 0.0
        %801 = vmatprep.subr.mxu0 0.0
        %802 = vmatpush1.msra.mxu0 0.0
        %803 = vmatprep.subr.mxu0 0.0
        %804 = vmatpush1.msra.mxu0 0.0
        %805 = vmatprep.subr.mxu0 0.0
        %806 = vmatpush1.msra.mxu0 0.0
        %807 = vmatprep.subr.mxu0 0.0
        %808 = vmatpush1.msra.mxu0 0.0
        %809 = vmatprep.subr.mxu0 0.0
        %810 = vmatpush1.msra.mxu0 0.0
        %811 = vmatprep.subr.mxu0 0.0
        %812 = vmatpush1.msra.mxu0 0.0
        %813 = vmatprep.subr.mxu0 0.0
        %814 = vmatpush1.msra.mxu0 0.0
        %815 = vmatprep.subr.mxu0 0.0
        %816 = vmatpush1.msra.mxu0 0.0
        %817 = vmatprep.subr.mxu0 0.0
        %818 = vmatpush1.msra.mxu0 0.0
        %819 = vmatprep.subr.mxu0 0.0
        %820 = vmatpush1.msra.mxu0 0.0
        %821 = vmatprep.subr.mxu0 0.0
        %822 = vmatpush1.msra.mxu0 0.0
        %823 = vmatprep.subr.mxu0 0.0
        %824 = vmatpush1.msra.mxu0 0.0
        %825 = vmatprep.mubr.f32.mxu0 0.0
        %826 = vmatmul.mubr.f32.gmra.mrb[0].mxu0 %v759
        %v827 = vpop.f32.mrb[0].mxu0
        %v828 = vadd.f32 0.0, %v827
        %v829 = vpop.f32.mrb[0].mxu0
        %830 = vdwg.mxu0
        %v832 = vsel %vm427, %v589, 0
        %834 = vmatprep.subr.mxu0 0.0
        %835 = vmatpush1.msra.mxu0 %v419
        %836 = vmatprep.subr.mxu0 0.0
        %837 = vmatpush1.msra.mxu0 0.0
        %838 = vmatprep.subr.mxu0 0.0
        %839 = vmatpush1.msra.mxu0 0.0
        %840 = vmatprep.subr.mxu0 0.0
        %841 = vmatpush1.msra.mxu0 0.0
        %842 = vmatprep.subr.mxu0 0.0
        %843 = vmatpush1.msra.mxu0 0.0
        %844 = vmatprep.subr.mxu0 0.0
        %845 = vmatpush1.msra.mxu0 0.0
        %846 = vmatprep.subr.mxu0 0.0
        %847 = vmatpush1.msra.mxu0 0.0
        %848 = vmatprep.subr.mxu0 0.0
        %849 = vmatpush1.msra.mxu0 0.0
        %850 = vmatprep.subr.mxu0 0.0
        %851 = vmatpush1.msra.mxu0 0.0
        %852 = vmatprep.subr.mxu0 0.0
        %853 = vmatpush1.msra.mxu0 0.0
        %854 = vmatprep.subr.mxu0 0.0
        %855 = vmatpush1.msra.mxu0 0.0
        %856 = vmatprep.subr.mxu0 0.0
        %857 = vmatpush1.msra.mxu0 0.0
        %858 = vmatprep.subr.mxu0 0.0
        %859 = vmatpush1.msra.mxu0 0.0
        %860 = vmatprep.subr.mxu0 0.0
        %861 = vmatpush1.msra.mxu0 0.0
        %862 = vmatprep.subr.mxu0 0.0
        %863 = vmatpush1.msra.mxu0 0.0
        %864 = vmatprep.subr.mxu0 0.0
        %865 = vmatpush1.msra.mxu0 0.0
        %866 = vmatprep.subr.mxu0 0.0
        %867 = vmatpush1.msra.mxu0 0.0
        %868 = vmatprep.subr.mxu0 0.0
        %869 = vmatpush1.msra.mxu0 0.0
        %870 = vmatprep.subr.mxu0 0.0
        %871 = vmatpush1.msra.mxu0 0.0
        %872 = vmatprep.subr.mxu0 0.0
        %873 = vmatpush1.msra.mxu0 0.0
        %874 = vmatprep.subr.mxu0 0.0
        %875 = vmatpush1.msra.mxu0 0.0
        %876 = vmatprep.subr.mxu0 0.0
        %877 = vmatpush1.msra.mxu0 0.0
        %878 = vmatprep.subr.mxu0 0.0
        %879 = vmatpush1.msra.mxu0 0.0
        %880 = vmatprep.subr.mxu0 0.0
        %881 = vmatpush1.msra.mxu0 0.0
        %882 = vmatprep.subr.mxu0 0.0
        %883 = vmatpush1.msra.mxu0 0.0
        %884 = vmatprep.subr.mxu0 0.0
        %885 = vmatpush1.msra.mxu0 0.0
        %886 = vmatprep.subr.mxu0 0.0
        %887 = vmatpush1.msra.mxu0 0.0
        %888 = vmatprep.subr.mxu0 0.0
        %889 = vmatpush1.msra.mxu0 0.0
        %890 = vmatprep.subr.mxu0 0.0
        %891 = vmatpush1.msra.mxu0 0.0
        %892 = vmatprep.subr.mxu0 0.0
        %893 = vmatpush1.msra.mxu0 0.0
        %894 = vmatprep.subr.mxu0 0.0
        %895 = vmatpush1.msra.mxu0 0.0
        %896 = vmatprep.subr.mxu0 0.0
        %897 = vmatpush1.msra.mxu0 0.0
        %898 = vmatprep.mubr.f32.mxu0 0.0
        %899 = vmatmul.mubr.f32.gmra.mrb[0].mxu0 %v832
        %v900 = vpop.f32.mrb[0].mxu0
        %v901 = vadd.f32 %v828, %v900
        %v902 = vpop.f32.mrb[0].mxu0
        %903 = vdwg.mxu0
        %904 = vrot.lane.b32.xlu0 %v423, 112
        %v905 = vpop.permute.xlu0 %904
        %906 = vrot.lane.b32.xlu0 %v415, 80
        %v907 = vpop.permute.xlu0 %906
        %v908 = vsel %vm427, %v905, 0
        %v910 = vsel %vm427, %v907, 0
        %912 = vmatprep.subr.mxu0 0.0
        %913 = vmatpush1.xpose.msra.mxu0 %v910
        %914 = vmatprep.subr.mxu0 0.0
        %915 = vmatpush1.xpose.msra.mxu0 0.0
        %916 = vmatprep.subr.mxu0 0.0
        %917 = vmatpush1.xpose.msra.mxu0 0.0
        %918 = vmatprep.subr.mxu0 0.0
        %919 = vmatpush1.xpose.msra.mxu0 0.0
        %920 = vmatprep.subr.mxu0 0.0
        %921 = vmatpush1.xpose.msra.mxu0 0.0
        %922 = vmatprep.subr.mxu0 0.0
        %923 = vmatpush1.xpose.msra.mxu0 0.0
        %924 = vmatprep.subr.mxu0 0.0
        %925 = vmatpush1.xpose.msra.mxu0 0.0
        %926 = vmatprep.subr.mxu0 0.0
        %927 = vmatpush1.xpose.msra.mxu0 0.0
        %928 = vmatprep.subr.mxu0 0.0
        %929 = vmatpush1.xpose.msra.mxu0 0.0
        %930 = vmatprep.subr.mxu0 0.0
        %931 = vmatpush1.xpose.msra.mxu0 0.0
        %932 = vmatprep.subr.mxu0 0.0
        %933 = vmatpush1.xpose.msra.mxu0 0.0
        %934 = vmatprep.subr.mxu0 0.0
        %935 = vmatpush1.xpose.msra.mxu0 0.0
        %936 = vmatprep.subr.mxu0 0.0
        %937 = vmatpush1.xpose.msra.mxu0 0.0
        %938 = vmatprep.subr.mxu0 0.0
        %939 = vmatpush1.xpose.msra.mxu0 0.0
        %940 = vmatprep.subr.mxu0 0.0
        %941 = vmatpush1.xpose.msra.mxu0 0.0
        %942 = vmatprep.subr.mxu0 0.0
        %943 = vmatpush1.xpose.msra.mxu0 0.0
        %944 = vmatprep.subr.mxu0 0.0
        %945 = vmatpush1.xpose.msra.mxu0 0.0
        %946 = vmatprep.subr.mxu0 0.0
        %947 = vmatpush1.xpose.msra.mxu0 0.0
        %948 = vmatprep.subr.mxu0 0.0
        %949 = vmatpush1.xpose.msra.mxu0 0.0
        %950 = vmatprep.subr.mxu0 0.0
        %951 = vmatpush1.xpose.msra.mxu0 0.0
        %952 = vmatprep.subr.mxu0 0.0
        %953 = vmatpush1.xpose.msra.mxu0 0.0
        %954 = vmatprep.subr.mxu0 0.0
        %955 = vmatpush1.xpose.msra.mxu0 0.0
        %956 = vmatprep.subr.mxu0 0.0
        %957 = vmatpush1.xpose.msra.mxu0 0.0
        %958 = vmatprep.subr.mxu0 0.0
        %959 = vmatpush1.xpose.msra.mxu0 0.0
        %960 = vmatprep.subr.mxu0 0.0
        %961 = vmatpush1.xpose.msra.mxu0 0.0
        %962 = vmatprep.subr.mxu0 0.0
        %963 = vmatpush1.xpose.msra.mxu0 0.0
        %964 = vmatprep.subr.mxu0 0.0
        %965 = vmatpush1.xpose.msra.mxu0 0.0
        %966 = vmatprep.subr.mxu0 0.0
        %967 = vmatpush1.xpose.msra.mxu0 0.0
        %968 = vmatprep.subr.mxu0 0.0
        %969 = vmatpush1.xpose.msra.mxu0 0.0
        %970 = vmatprep.subr.mxu0 0.0
        %971 = vmatpush1.xpose.msra.mxu0 0.0
        %972 = vmatprep.subr.mxu0 0.0
        %973 = vmatpush1.xpose.msra.mxu0 0.0
        %974 = vmatprep.subr.mxu0 0.0
        %975 = vmatpush1.xpose.msra.mxu0 0.0
        %976 = vmatprep.mubr.f32.mxu0 0.0
        %977 = vmatmul.mubr.f32.gmra.mrb[0].mxu0 %v908
        %v978 = vpop.f32.mrb[0].mxu0
        %v979 = vadd.f32 0.0, %v978
        %v980 = vpop.f32.mrb[0].mxu0
        %981 = vdwg.mxu0
        %v982 = vsel %vm503, -1e+09, %v979
        %v983 = vsel %vm427, %v982, -inf
        %984 = vmax.xlane.f32.xlu0 %v983
        %v985 = vpop.xlane.xlu0 %984
        %v986 = vsub.f32 %v982, %v985
        %v987 = vmul.f32 %v986, 1.442695
        %v988 = vpow.pop %v987
        %v989 = vsel %vm427, %v988, 0.0
        %990 = vadd.xlane.f32.xlu0 %v989
        %v991 = vpop.xlane.xlu0 %990
        %v992 = vrcp.pop %v991
        %v993 = vmul.f32 %v988, %v992
        %994 = vrot.lane.b32.xlu0 %v415, 48
        %v995 = vpop.permute.xlu0 %994
        %v998 = vsel %vm427, %v993, 0
        %1000 = vmatprep.subr.mxu0 0.0
        %1001 = vmatpush1.msra.mxu0 %v995
        %1002 = vmatprep.subr.mxu0 0.0
        %1003 = vmatpush1.msra.mxu0 0.0
        %1004 = vmatprep.subr.mxu0 0.0
        %1005 = vmatpush1.msra.mxu0 0.0
        %1006 = vmatprep.subr.mxu0 0.0
        %1007 = vmatpush1.msra.mxu0 0.0
        %1008 = vmatprep.subr.mxu0 0.0
        %1009 = vmatpush1.msra.mxu0 0.0
        %1010 = vmatprep.subr.mxu0 0.0
        %1011 = vmatpush1.msra.mxu0 0.0
        %1012 = vmatprep.subr.mxu0 0.0
        %1013 = vmatpush1.msra.mxu0 0.0
        %1014 = vmatprep.subr.mxu0 0.0
        %1015 = vmatpush1.msra.mxu0 0.0
        %1016 = vmatprep.subr.mxu0 0.0
        %1017 = vmatpush1.msra.mxu0 0.0
        %1018 = vmatprep.subr.mxu0 0.0
        %1019 = vmatpush1.msra.mxu0 0.0
        %1020 = vmatprep.subr.mxu0 0.0
        %1021 = vmatpush1.msra.mxu0 0.0
        %1022 = vmatprep.subr.mxu0 0.0
        %1023 = vmatpush1.msra.mxu0 0.0
        %1024 = vmatprep.subr.mxu0 0.0
        %1025 = vmatpush1.msra.mxu0 0.0
        %1026 = vmatprep.subr.mxu0 0.0
        %1027 = vmatpush1.msra.mxu0 0.0
        %1028 = vmatprep.subr.mxu0 0.0
        %1029 = vmatpush1.msra.mxu0 0.0
        %1030 = vmatprep.subr.mxu0 0.0
        %1031 = vmatpush1.msra.mxu0 0.0
        %1032 = vmatprep.subr.mxu0 0.0
        %1033 = vmatpush1.msra.mxu0 0.0
        %1034 = vmatprep.subr.mxu0 0.0
        %1035 = vmatpush1.msra.mxu0 0.0
        %1036 = vmatprep.subr.mxu0 0.0
        %1037 = vmatpush1.msra.mxu0 0.0
        %1038 = vmatprep.subr.mxu0 0.0
        %1039 = vmatpush1.msra.mxu0 0.0
        %1040 = vmatprep.subr.mxu0 0.0
        %1041 = vmatpush1.msra.mxu0 0.0
        %1042 = vmatprep.subr.mxu0 0.0
        %1043 = vmatpush1.msra.mxu0 0.0
        %1044 = vmatprep.subr.mxu0 0.0
        %1045 = vmatpush1.msra.mxu0 0.0
        %1046 = vmatprep.subr.mxu0 0.0
        %1047 = vmatpush1.msra.mxu0 0.0
        %1048 = vmatprep.subr.mxu0 0.0
        %1049 = vmatpush1.msra.mxu0 0.0
        %1050 = vmatprep.subr.mxu0 0.0
        %1051 = vmatpush1.msra.mxu0 0.0
        %1052 = vmatprep.subr.mxu0 0.0
        %1053 = vmatpush1.msra.mxu0 0.0
        %1054 = vmatprep.subr.mxu0 0.0
        %1055 = vmatpush1.msra.mxu0 0.0
        %1056 = vmatprep.subr.mxu0 0.0
        %1057 = vmatpush1.msra.mxu0 0.0
        %1058 = vmatprep.subr.mxu0 0.0
        %1059 = vmatpush1.msra.mxu0 0.0
        %1060 = vmatprep.subr.mxu0 0.0
        %1061 = vmatpush1.msra.mxu0 0.0
        %1062 = vmatprep.subr.mxu0 0.0
        %1063 = vmatpush1.msra.mxu0 0.0
        %1064 = vmatprep.mubr.f32.mxu0 0.0
        %1065 = vmatmul.mubr.f32.gmra.mrb[0].mxu0 %v998
        %v1066 = vpop.f32.mrb[0].mxu0
        %v1067 = vadd.f32 0.0, %v1066
        %v1068 = vpop.f32.mrb[0].mxu0
        %1069 = vdwg.mxu0
        %v1071 = vsel %vm427, %v1067, 0
        %1073 = vmatprep.subr.mxu0 0.0
        %1074 = vmatpush1.msra.mxu0 %v421
        %1075 = vmatprep.subr.mxu0 0.0
        %1076 = vmatpush1.msra.mxu0 0.0
        %1077 = vmatprep.subr.mxu0 0.0
        %1078 = vmatpush1.msra.mxu0 0.0
        %1079 = vmatprep.subr.mxu0 0.0
        %1080 = vmatpush1.msra.mxu0 0.0
        %1081 = vmatprep.subr.mxu0 0.0
        %1082 = vmatpush1.msra.mxu0 0.0
        %1083 = vmatprep.subr.mxu0 0.0
        %1084 = vmatpush1.msra.mxu0 0.0
        %1085 = vmatprep.subr.mxu0 0.0
        %1086 = vmatpush1.msra.mxu0 0.0
        %1087 = vmatprep.subr.mxu0 0.0
        %1088 = vmatpush1.msra.mxu0 0.0
        %1089 = vmatprep.subr.mxu0 0.0
        %1090 = vmatpush1.msra.mxu0 0.0
        %1091 = vmatprep.subr.mxu0 0.0
        %1092 = vmatpush1.msra.mxu0 0.0
        %1093 = vmatprep.subr.mxu0 0.0
        %1094 = vmatpush1.msra.mxu0 0.0
        %1095 = vmatprep.subr.mxu0 0.0
        %1096 = vmatpush1.msra.mxu0 0.0
        %1097 = vmatprep.subr.mxu0 0.0
        %1098 = vmatpush1.msra.mxu0 0.0
        %1099 = vmatprep.subr.mxu0 0.0
        %1100 = vmatpush1.msra.mxu0 0.0
        %1101 = vmatprep.subr.mxu0 0.0
        %1102 = vmatpush1.msra.mxu0 0.0
        %1103 = vmatprep.subr.mxu0 0.0
        %1104 = vmatpush1.msra.mxu0 0.0
        %1105 = vmatprep.subr.mxu0 0.0
        %1106 = vmatpush1.msra.mxu0 0.0
        %1107 = vmatprep.subr.mxu0 0.0
        %1108 = vmatpush1.msra.mxu0 0.0
        %1109 = vmatprep.subr.mxu0 0.0
        %1110 = vmatpush1.msra.mxu0 0.0
        %1111 = vmatprep.subr.mxu0 0.0
        %1112 = vmatpush1.msra.mxu0 0.0
        %1113 = vmatprep.subr.mxu0 0.0
        %1114 = vmatpush1.msra.mxu0 0.0
        %1115 = vmatprep.subr.mxu0 0.0
        %1116 = vmatpush1.msra.mxu0 0.0
        %1117 = vmatprep.subr.mxu0 0.0
        %1118 = vmatpush1.msra.mxu0 0.0
        %1119 = vmatprep.subr.mxu0 0.0
        %1120 = vmatpush1.msra.mxu0 0.0
        %1121 = vmatprep.subr.mxu0 0.0
        %1122 = vmatpush1.msra.mxu0 0.0
        %1123 = vmatprep.subr.mxu0 0.0
        %1124 = vmatpush1.msra.mxu0 0.0
        %1125 = vmatprep.subr.mxu0 0.0
        %1126 = vmatpush1.msra.mxu0 0.0
        %1127 = vmatprep.subr.mxu0 0.0
        %1128 = vmatpush1.msra.mxu0 0.0
        %1129 = vmatprep.subr.mxu0 0.0
        %1130 = vmatpush1.msra.mxu0 0.0
        %1131 = vmatprep.subr.mxu0 0.0
        %1132 = vmatpush1.msra.mxu0 0.0
        %1133 = vmatprep.subr.mxu0 0.0
        %1134 = vmatpush1.msra.mxu0 0.0
        %1135 = vmatprep.subr.mxu0 0.0
        %1136 = vmatpush1.msra.mxu0 0.0
        %1137 = vmatprep.mubr.f32.mxu0 0.0
        %1138 = vmatmul.mubr.f32.gmra.mrb[0].mxu0 %v1071
        %v1139 = vpop.f32.mrb[0].mxu0
        %v1140 = vadd.f32 0.0, %v1139
        %v1141 = vpop.f32.mrb[0].mxu0
        %1142 = vdwg.mxu0
        %v1143 = vadd.f32 %v901, %v1140
        %1144 = vrot.lane.b32.xlu0 %v423, 104
        %v1145 = vpop.permute.xlu0 %1144
        %1146 = vrot.lane.b32.xlu0 %v415, 72
        %v1147 = vpop.permute.xlu0 %1146
        %v1148 = vsel %vm427, %v1145, 0
        %v1150 = vsel %vm427, %v1147, 0
        %1152 = vmatprep.subr.mxu0 0.0
        %1153 = vmatpush1.xpose.msra.mxu0 %v1150
        %1154 = vmatprep.subr.mxu0 0.0
        %1155 = vmatpush1.xpose.msra.mxu0 0.0
        %1156 = vmatprep.subr.mxu0 0.0
        %1157 = vmatpush1.xpose.msra.mxu0 0.0
        %1158 = vmatprep.subr.mxu0 0.0
        %1159 = vmatpush1.xpose.msra.mxu0 0.0
        %1160 = vmatprep.subr.mxu0 0.0
        %1161 = vmatpush1.xpose.msra.mxu0 0.0
        %1162 = vmatprep.subr.mxu0 0.0
        %1163 = vmatpush1.xpose.msra.mxu0 0.0
        %1164 = vmatprep.subr.mxu0 0.0
        %1165 = vmatpush1.xpose.msra.mxu0 0.0
        %1166 = vmatprep.subr.mxu0 0.0
        %1167 = vmatpush1.xpose.msra.mxu0 0.0
        %1168 = vmatprep.subr.mxu0 0.0
        %1169 = vmatpush1.xpose.msra.mxu0 0.0
        %1170 = vmatprep.subr.mxu0 0.0
        %1171 = vmatpush1.xpose.msra.mxu0 0.0
        %1172 = vmatprep.subr.mxu0 0.0
        %1173 = vmatpush1.xpose.msra.mxu0 0.0
        %1174 = vmatprep.subr.mxu0 0.0
        %1175 = vmatpush1.xpose.msra.mxu0 0.0
        %1176 = vmatprep.subr.mxu0 0.0
        %1177 = vmatpush1.xpose.msra.mxu0 0.0
        %1178 = vmatprep.subr.mxu0 0.0
        %1179 = vmatpush1.xpose.msra.mxu0 0.0
        %1180 = vmatprep.subr.mxu0 0.0
        %1181 = vmatpush1.xpose.msra.mxu0 0.0
        %1182 = vmatprep.subr.mxu0 0.0
        %1183 = vmatpush1.xpose.msra.mxu0 0.0
        %1184 = vmatprep.subr.mxu0 0.0
        %1185 = vmatpush1.xpose.msra.mxu0 0.0
        %1186 = vmatprep.subr.mxu0 0.0
        %1187 = vmatpush1.xpose.msra.mxu0 0.0
        %1188 = vmatprep.subr.mxu0 0.0
        %1189 = vmatpush1.xpose.msra.mxu0 0.0
        %1190 = vmatprep.subr.mxu0 0.0
        %1191 = vmatpush1.xpose.msra.mxu0 0.0
        %1192 = vmatprep.subr.mxu0 0.0
        %1193 = vmatpush1.xpose.msra.mxu0 0.0
        %1194 = vmatprep.subr.mxu0 0.0
        %1195 = vmatpush1.xpose.msra.mxu0 0.0
        %1196 = vmatprep.subr.mxu0 0.0
        %1197 = vmatpush1.xpose.msra.mxu0 0.0
        %1198 = vmatprep.subr.mxu0 0.0
        %1199 = vmatpush1.xpose.msra.mxu0 0.0
        %1200 = vmatprep.subr.mxu0 0.0
        %1201 = vmatpush1.xpose.msra.mxu0 0.0
        %1202 = vmatprep.subr.mxu0 0.0
        %1203 = vmatpush1.xpose.msra.mxu0 0.0
        %1204 = vmatprep.subr.mxu0 0.0
        %1205 = vmatpush1.xpose.msra.mxu0 0.0
        %1206 = vmatprep.subr.mxu0 0.0
        %1207 = vmatpush1.xpose.msra.mxu0 0.0
        %1208 = vmatprep.subr.mxu0 0.0
        %1209 = vmatpush1.xpose.msra.mxu0 0.0
        %1210 = vmatprep.subr.mxu0 0.0
        %1211 = vmatpush1.xpose.msra.mxu0 0.0
        %1212 = vmatprep.subr.mxu0 0.0
        %1213 = vmatpush1.xpose.msra.mxu0 0.0
        %1214 = vmatprep.subr.mxu0 0.0
        %1215 = vmatpush1.xpose.msra.mxu0 0.0
        %1216 = vmatprep.mubr.f32.mxu0 0.0
        %1217 = vmatmul.mubr.f32.gmra.mrb[0].mxu0 %v1148
        %v1218 = vpop.f32.mrb[0].mxu0
        %v1219 = vadd.f32 0.0, %v1218
        %v1220 = vpop.f32.mrb[0].mxu0
        %1221 = vdwg.mxu0
        %v1222 = vsel %vm503, -1e+09, %v1219
        %v1223 = vsel %vm427, %v1222, -inf
        %1224 = vmax.xlane.f32.xlu0 %v1223
        %v1225 = vpop.xlane.xlu0 %1224
        %v1226 = vsub.f32 %v1222, %v1225
        %v1227 = vmul.f32 %v1226, 1.442695
        %v1228 = vpow.pop %v1227
        %v1229 = vsel %vm427, %v1228, 0.0
        %1230 = vadd.xlane.f32.xlu0 %v1229
        %v1231 = vpop.xlane.xlu0 %1230
        %v1232 = vrcp.pop %v1231
        %v1233 = vmul.f32 %v1228, %v1232
        %1234 = vrot.lane.b32.xlu0 %v415, 40
        %v1235 = vpop.permute.xlu0 %1234
        %v1238 = vsel %vm427, %v1233, 0
        %1240 = vmatprep.subr.mxu0 0.0
        %1241 = vmatpush1.msra.mxu0 %v1235
        %1242 = vmatprep.subr.mxu0 0.0
        %1243 = vmatpush1.msra.mxu0 0.0
        %1244 = vmatprep.subr.mxu0 0.0
        %1245 = vmatpush1.msra.mxu0 0.0
        %1246 = vmatprep.subr.mxu0 0.0
        %1247 = vmatpush1.msra.mxu0 0.0
        %1248 = vmatprep.subr.mxu0 0.0
        %1249 = vmatpush1.msra.mxu0 0.0
        %1250 = vmatprep.subr.mxu0 0.0
        %1251 = vmatpush1.msra.mxu0 0.0
        %1252 = vmatprep.subr.mxu0 0.0
        %1253 = vmatpush1.msra.mxu0 0.0
        %1254 = vmatprep.subr.mxu0 0.0
        %1255 = vmatpush1.msra.mxu0 0.0
        %1256 = vmatprep.subr.mxu0 0.0
        %1257 = vmatpush1.msra.mxu0 0.0
        %1258 = vmatprep.subr.mxu0 0.0
        %1259 = vmatpush1.msra.mxu0 0.0
        %1260 = vmatprep.subr.mxu0 0.0
        %1261 = vmatpush1.msra.mxu0 0.0
        %1262 = vmatprep.subr.mxu0 0.0
        %1263 = vmatpush1.msra.mxu0 0.0
        %1264 = vmatprep.subr.mxu0 0.0
        %1265 = vmatpush1.msra.mxu0 0.0
        %1266 = vmatprep.subr.mxu0 0.0
        %1267 = vmatpush1.msra.mxu0 0.0
        %1268 = vmatprep.subr.mxu0 0.0
        %1269 = vmatpush1.msra.mxu0 0.0
        %1270 = vmatprep.subr.mxu0 0.0
        %1271 = vmatpush1.msra.mxu0 0.0
        %1272 = vmatprep.subr.mxu0 0.0
        %1273 = vmatpush1.msra.mxu0 0.0
        %1274 = vmatprep.subr.mxu0 0.0
        %1275 = vmatpush1.msra.mxu0 0.0
        %1276 = vmatprep.subr.mxu0 0.0
        %1277 = vmatpush1.msra.mxu0 0.0
        %1278 = vmatprep.subr.mxu0 0.0
        %1279 = vmatpush1.msra.mxu0 0.0
        %1280 = vmatprep.subr.mxu0 0.0
        %1281 = vmatpush1.msra.mxu0 0.0
        %1282 = vmatprep.subr.mxu0 0.0
        %1283 = vmatpush1.msra.mxu0 0.0
        %1284 = vmatprep.subr.mxu0 0.0
        %1285 = vmatpush1.msra.mxu0 0.0
        %1286 = vmatprep.subr.mxu0 0.0
        %1287 = vmatpush1.msra.mxu0 0.0
        %1288 = vmatprep.subr.mxu0 0.0
        %1289 = vmatpush1.msra.mxu0 0.0
        %1290 = vmatprep.subr.mxu0 0.0
        %1291 = vmatpush1.msra.mxu0 0.0
        %1292 = vmatprep.subr.mxu0 0.0
        %1293 = vmatpush1.msra.mxu0 0.0
        %1294 = vmatprep.subr.mxu0 0.0
        %1295 = vmatpush1.msra.mxu0 0.0
        %1296 = vmatprep.subr.mxu0 0.0
        %1297 = vmatpush1.msra.mxu0 0.0
        %1298 = vmatprep.subr.mxu0 0.0
        %1299 = vmatpush1.msra.mxu0 0.0
        %1300 = vmatprep.subr.mxu0 0.0
        %1301 = vmatpush1.msra.mxu0 0.0
        %1302 = vmatprep.subr.mxu0 0.0
        %1303 = vmatpush1.msra.mxu0 0.0
        %1304 = vmatprep.mubr.f32.mxu0 0.0
        %1305 = vmatmul.mubr.f32.gmra.mrb[0].mxu0 %v1238
        %v1306 = vpop.f32.mrb[0].mxu0
        %v1307 = vadd.f32 0.0, %v1306
        %v1308 = vpop.f32.mrb[0].mxu0
        %1309 = vdwg.mxu0
        %v1311 = vsel %vm427, %v1307, 0
        %1313 = vmatprep.subr.mxu0 0.0
        %1314 = vmatpush1.msra.mxu0 %v422
        %1315 = vmatprep.subr.mxu0 0.0
        %1316 = vmatpush1.msra.mxu0 0.0
        %1317 = vmatprep.subr.mxu0 0.0
        %1318 = vmatpush1.msra.mxu0 0.0
        %1319 = vmatprep.subr.mxu0 0.0
        %1320 = vmatpush1.msra.mxu0 0.0
        %1321 = vmatprep.subr.mxu0 0.0
        %1322 = vmatpush1.msra.mxu0 0.0
        %1323 = vmatprep.subr.mxu0 0.0
        %1324 = vmatpush1.msra.mxu0 0.0
        %1325 = vmatprep.subr.mxu0 0.0
        %1326 = vmatpush1.msra.mxu0 0.0
        %1327 = vmatprep.subr.mxu0 0.0
        %1328 = vmatpush1.msra.mxu0 0.0
        %1329 = vmatprep.subr.mxu0 0.0
        %1330 = vmatpush1.msra.mxu0 0.0
        %1331 = vmatprep.subr.mxu0 0.0
        %1332 = vmatpush1.msra.mxu0 0.0
        %1333 = vmatprep.subr.mxu0 0.0
        %1334 = vmatpush1.msra.mxu0 0.0
        %1335 = vmatprep.subr.mxu0 0.0
        %1336 = vmatpush1.msra.mxu0 0.0
        %1337 = vmatprep.subr.mxu0 0.0
        %1338 = vmatpush1.msra.mxu0 0.0
        %1339 = vmatprep.subr.mxu0 0.0
        %1340 = vmatpush1.msra.mxu0 0.0
        %1341 = vmatprep.subr.mxu0 0.0
        %1342 = vmatpush1.msra.mxu0 0.0
        %1343 = vmatprep.subr.mxu0 0.0
        %1344 = vmatpush1.msra.mxu0 0.0
        %1345 = vmatprep.subr.mxu0 0.0
        %1346 = vmatpush1.msra.mxu0 0.0
        %1347 = vmatprep.subr.mxu0 0.0
        %1348 = vmatpush1.msra.mxu0 0.0
        %1349 = vmatprep.subr.mxu0 0.0
        %1350 = vmatpush1.msra.mxu0 0.0
        %1351 = vmatprep.subr.mxu0 0.0
        %1352 = vmatpush1.msra.mxu0 0.0
        %1353 = vmatprep.subr.mxu0 0.0
        %1354 = vmatpush1.msra.mxu0 0.0
        %1355 = vmatprep.subr.mxu0 0.0
        %1356 = vmatpush1.msra.mxu0 0.0
        %1357 = vmatprep.subr.mxu0 0.0
        %1358 = vmatpush1.msra.mxu0 0.0
        %1359 = vmatprep.subr.mxu0 0.0
        %1360 = vmatpush1.msra.mxu0 0.0
        %1361 = vmatprep.subr.mxu0 0.0
        %1362 = vmatpush1.msra.mxu0 0.0
        %1363 = vmatprep.subr.mxu0 0.0
        %1364 = vmatpush1.msra.mxu0 0.0
        %1365 = vmatprep.subr.mxu0 0.0
        %1366 = vmatpush1.msra.mxu0 0.0
        %1367 = vmatprep.subr.mxu0 0.0
        %1368 = vmatpush1.msra.mxu0 0.0
        %1369 = vmatprep.subr.mxu0 0.0
        %1370 = vmatpush1.msra.mxu0 0.0
        %1371 = vmatprep.subr.mxu0 0.0
        %1372 = vmatpush1.msra.mxu0 0.0
        %1373 = vmatprep.subr.mxu0 0.0
        %1374 = vmatpush1.msra.mxu0 0.0
        %1375 = vmatprep.subr.mxu0 0.0
        %1376 = vmatpush1.msra.mxu0 0.0
        %1377 = vmatprep.mubr.f32.mxu0 0.0
        %1378 = vmatmul.mubr.f32.gmra.mrb[0].mxu0 %v1311
        %v1379 = vpop.f32.mrb[0].mxu0
        %v1380 = vadd.f32 0.0, %v1379
        %v1381 = vpop.f32.mrb[0].mxu0
        %1382 = vdwg.mxu0
        %v1383 = vadd.f32 %v1143, %v1380
        %v1384 = vadd.f32 %v309, %v1383
        %v1385 = vld [vmem:[%s5] sm:$0x1]
        %v1387 = vlaneseq
        %v1388 = vshrl.u32 %v1387, 7
        %v1389 = vsub.s32 0, %v1388
        %v1390 = vrot.slane %v1385, %v1389
        %v1392 = vadd.f32 %v1384, %v1390
        %1393 = vst.msk [vmem:[%s308] sm:$0xff] %vm310, %v1392
        %s1394 = sand.u32 %s164, 1
        %s1395 = scalar_lea.sflag [#allocation4], %s1394
        %s1396 = sand.u32 %s164, 1
        %s1397 = smul.addr %s1396, 8
        %s1398 = scalar_lea.vmem [#allocation10], %s1397
        // Predicated region
        $region61: #{tpu_custom_call.1} parent=43 // pred_check
          %p1399 = pneg %p174
        $region62: #{tpu_custom_call.1} parent=43 // pred_check_branch
          %1401 = sbr.rel (%p1399) target = $region64
        $region63: #{tpu_custom_call.1} parent=43 // pred_region
          %s1403 = ssub.s32 128, 128
          %1404 = vsyncadd %s1395, %s1403
          %s1405 = smul.addr %s25, 128
          %s1406 = scalar_lea.hbm %s6, %s1405
          %s1408 = sshll.u32 %s1398, 4
          %s1409 = int_to_ptr.vmem [resolvable:$true] %s1408
          %1411 = dma.vmem_to_hbm [thread:$0]  %s1409, 128, %s1406, %s1395
        $region64: #{tpu_custom_call.1} parent=43 // pred_fallthru
          _
      $region44: #{tpu_custom_call.1} parent=5 // pred_fallthru
        _
      %p1412 = scmp.le.s32.totalorder 2, %s20
      // Predicated region
      $region65: #{tpu_custom_call.1} parent=5 // pred_check
        %p1413 = pneg %p1412
      $region66: #{tpu_custom_call.1} parent=5 // pred_check_branch
        %1415 = sbr.rel (%p1413) target = $region68
      $region67: #{tpu_custom_call.1} parent=5 // pred_region
        %s1416 = ssub.s32 %s20, 2
        // Predicated region
        $region69: #{tpu_custom_call.1} parent=67 // pred_check
          %p1417 = pneg %p180
        $region70: #{tpu_custom_call.1} parent=67 // pred_check_branch
          %1419 = sbr.rel (%p1417) target = $region72
        $region71: #{tpu_custom_call.1} parent=67 // pred_region
          %s1420 = sand.u32 %s165, 1
          %s1421 = scalar_lea.sflag [#allocation4], %s1420
          %s1422 = sand.u32 %s165, 1
          %s1423 = smul.addr %s1422, 8
          %s1424 = scalar_lea.vmem [#allocation10], %s1423
          %1425 = dma.done %s1421, 128
        $region72: #{tpu_custom_call.1} parent=67 // pred_fallthru
          _
      $region68: #{tpu_custom_call.1} parent=5 // pred_fallthru
        _
    $region6: #{tpu_custom_call.1} parent=1 // loop_footer
      %s24 = sadd.s32 1, %s20
    $region7: #{tpu_custom_call.1} parent=1 // loop_footer_branch
      %19 = sbr.rel target = $region3
    $region8: #{tpu_custom_call.1} parent=1 // loop_exit
      _
    %1426 = vsyncpa [#allocation3], 1
    %s1427 = scalar_lea.sflag [#allocation3], 1
    %1428 = vsyncpa %s1427, 1
    %1429 = vsyncpa [#allocation6], 1
    %1430 = vsyncpa [#allocation9], 1
    %1431 = vsyncpa [#allocation4], 1
    %s1432 = scalar_lea.sflag [#allocation4], 1
    %1433 = vsyncpa %s1432, 1

</llo_original>
